<compile_context>
chip_gen: v7x
topology: tpu7x:2x2x1
jax: 0.10.0
libtpu: 0.0.40
codegen_flags: <defaults>
</compile_context>

<pallas_src>
import jax
import jax.numpy as jnp
from jax.experimental import pallas as pl
from jax.experimental.pallas import tpu as pltpu

# Stand-in encoder config: cumulative feature strides [4, 8, 16, 32].
STAGE_STRIDES = (4, 2, 2, 2)          # per-stage downsample factors
STAGE_CHANNELS = (8, 16, 32, 64)      # small synthetic embed dims
NUM_CLASSES = 2                       # classifier out channels = num_classes - 1
ACT_DTYPE = jnp.bfloat16              # inter-stage activation storage dtype


# ----------------------------------------------------------------------------
# Host-side helpers (fused "im2col"-style weights for lane-dense slabs)
# ----------------------------------------------------------------------------

def _fused_stage_weight(w_mat, s, wo_out):
    """(W_in*Cin, Wo_out*Cout) block matrix folding s-column average pooling
    (carries the full 1/s^2 window-mean factor; the in-kernel row pooling is a
    plain sum) and the 1x1 conv, for lane-dense (H, W*C) activation slabs."""
    cin, cout = w_mat.shape
    w_in = wo_out * s
    col_sel = (jnp.arange(w_in)[:, None] // s ==
               jnp.arange(wo_out)[None, :]).astype(w_mat.dtype)     # (W_in, Wo)
    big = (col_sel[:, None, :, None] * w_mat[None, :, None, :]) / float(s * s)
    # index [w_in*Cin + cin, wo*Cout + cout]
    return big.reshape(w_in * cin, wo_out * cout)


def _fused_bias(b_vec, wo_out):
    """(1, Wo_out*Cout) bias tiled over output columns."""
    return jnp.tile(b_vec, (wo_out,)).reshape(1, -1)


def _pick_rows_per_block(ho, s, lane_in, itemsize, budget=4 << 20):
    """Largest divisor `th` of `ho` whose input row block (th*s, lane_in) fits
    `budget` bytes; restricted to th == ho or th % 16 == 0 so the bf16 output
    block (th, lane_out) keeps clean sublane tiling."""
    valid = [t for t in range(1, ho + 1)
             if ho % t == 0 and (t == ho or t % 16 == 0)]
    fitting = [t for t in valid if t * s * lane_in * itemsize <= budget]
    return max(fitting) if fitting else min(valid)


# ----------------------------------------------------------------------------
# Pallas kernels
# ----------------------------------------------------------------------------

def _make_stage1_kernel(th, s):
    """Fused |x1-x2| + s x s avg-pool + 1x1 conv + bias + ReLU over one
    lane-dense row block.

    Block layouts:
      x1/x2 : (1, th*s, W*Cin)   f32
      w     : (W*Cin, Wo*Cout)   f32  (fused pooling+conv block matrix)
      b     : (1, Wo*Cout)       f32
      out   : (1, th, Wo*Cout)   ACT_DTYPE (lane-dense store)
    """

    def kernel(x1_ref, x2_ref, w_ref, b_ref, o_ref):
        x1 = x1_ref[0].astype(jnp.float32)              # (th*s, W*Cin)
        x2 = x2_ref[0].astype(jnp.float32)
        xd = jnp.abs(x1 - x2)
        lane = xd.shape[-1]
        rows = jnp.sum(xd.reshape(th, s, lane), axis=1)  # (th, W*Cin) row pooling
        y = jnp.dot(rows, w_ref[...],
                    preferred_element_type=jnp.float32) + b_ref[...]
        o_ref[0] = jnp.maximum(y, 0.0).astype(o_ref.dtype)

    return kernel


def _make_tail_kernel(strides):
    """Fused stages 2-4 (pool + 1x1 conv + ReLU each) + global average pool +
    1x1 classifier (no bias), one batch item per grid step.

    All activations stay lane-dense (rows, Wo*C) in vregs/VMEM; each stage is
    one row-group sum plus one (rows, 128) @ (128, 128) matmul."""

    def kernel(f_ref, w2_ref, b2_ref, w3_ref, b3_ref, w4_ref, b4_ref,
               wc_ref, o_ref):
        feat = f_ref[0].astype(jnp.float32)             # (Ho1, Wo1*C1)
        for w_ref, b_ref, s in ((w2_ref, b2_ref, strides[0]),
                                (w3_ref, b3_ref, strides[1]),
                                (w4_ref, b4_ref, strides[2])):
            ho_out = feat.shape[0] // s
            rows = jnp.sum(feat.reshape(ho_out, s, feat.shape[1]), axis=1)
            feat = jnp.maximum(
                jnp.dot(rows, w_ref[...],
                        preferred_element_type=jnp.float32) + b_ref[...],
                0.0)                                     # (Ho_k, Wo_k*C_k)
        # GAP + classifier: wc carries 1/(Ho4*Wo4) and the wo4-tiling, so a
        # plain row sum followed by one matmul gives the pooled logits.
        gap = jnp.sum(feat, axis=0, keepdims=True)       # (1, Wo4*C4)
        o_ref[0] = jnp.dot(gap, wc_ref[...],
                           preferred_element_type=jnp.float32)   # (1, K)

    return kernel


# ----------------------------------------------------------------------------
# pallas_call wrappers
# ----------------------------------------------------------------------------

def encoder_stage1_absdiff(x1, x2, w_big, b_big, s, out_dtype):
    """x1/x2: (B, H, W*Cin) lane-dense slabs -> (B, H//s, (W//s)*Cout)."""
    b, h, lane_in = x1.shape
    ho = h // s
    lane_out = w_big.shape[1]
    th = _pick_rows_per_block(ho, s, lane_in, x1.dtype.itemsize)
    grid = (b, ho // th)
    kernel = _make_stage1_kernel(th, s)
    return pl.pallas_call(
        kernel,
        out_shape=jax.ShapeDtypeStruct((b, ho, lane_out), out_dtype),
        grid=grid,
        in_specs=[
            pl.BlockSpec((1, th * s, lane_in), lambda bi, hb: (bi, hb, 0)),
            pl.BlockSpec((1, th * s, lane_in), lambda bi, hb: (bi, hb, 0)),
            pl.BlockSpec(w_big.shape, lambda bi, hb: (0, 0)),
            pl.BlockSpec(b_big.shape, lambda bi, hb: (0, 0)),
        ],
        out_specs=pl.BlockSpec((1, th, lane_out), lambda bi, hb: (bi, hb, 0)),
        compiler_params=pltpu.CompilerParams(
            dimension_semantics=("parallel", "parallel"),
            vmem_limit_bytes=32 * 1024 * 1024),
    )(x1, x2, w_big, b_big)


def encoder_tail_and_classifier(feat1, w2, b2, w3, b3, w4, b4, w_cls_big):
    """feat1: (B, Ho1, Wo1*C1) -> logits (B, 1, K); gridded over B."""
    b, ho1, lane = feat1.shape
    k = w_cls_big.shape[1]
    kernel = _make_tail_kernel(STAGE_STRIDES[1:])
    const2 = lambda bi: (0, 0)
    return pl.pallas_call(
        kernel,
        out_shape=jax.ShapeDtypeStruct((b, 1, k), jnp.float32),
        grid=(b,),
        in_specs=[
            pl.BlockSpec((1, ho1, lane), lambda bi: (bi, 0, 0)),
            pl.BlockSpec(w2.shape, const2),
            pl.BlockSpec(b2.shape, const2),
            pl.BlockSpec(w3.shape, const2),
            pl.BlockSpec(b3.shape, const2),
            pl.BlockSpec(w4.shape, const2),
            pl.BlockSpec(b4.shape, const2),
            pl.BlockSpec(w_cls_big.shape, const2),
        ],
        out_specs=pl.BlockSpec((1, 1, k), lambda bi: (bi, 0, 0)),
        compiler_params=pltpu.CompilerParams(
            dimension_semantics=("parallel",)),
    )(feat1, w2, b2, w3, b3, w4, b4, w_cls_big)


# ----------------------------------------------------------------------------
# Parameters & forward
# ----------------------------------------------------------------------------

def init_params(key, c_in=3):
    params = {"stages": []}
    chans = (c_in,) + STAGE_CHANNELS
    for i in range(4):
        key, kw, kb = jax.random.split(key, 3)
        cin, cout = chans[i], chans[i + 1]
        w_mat = jax.random.normal(kw, (cin, cout), jnp.float32) / jnp.sqrt(cin)
        b_vec = jax.random.normal(kb, (cout,), jnp.float32) * 0.01
        params["stages"].append((w_mat, b_vec))
    key, kc = jax.random.split(key)
    c4 = STAGE_CHANNELS[-1]
    # nn.Conv2d(C4, num_classes-1, 1, bias=False).weight is (K, C4, 1, 1);
    # stored here as its (C4, K) transpose for the matmul.
    params["classifier_w"] = jax.random.normal(
        kc, (c4, NUM_CLASSES - 1), jnp.float32) / jnp.sqrt(c4)
    return params


def transwcd_single_forward(params, x1_nchw, x2_nchw):
    """Mirrors TransWCD_single.forward(x1, x2, cam_only=False), pooling='gap'."""
    b, cin, h, w = x1_nchw.shape
    total_stride = 1
    for s in STAGE_STRIDES:
        total_stride *= s
    assert h % total_stride == 0 and w % total_stride == 0, (h, w)

    # NCHW -> lane-dense (B, H, W*Cin) slabs (wrapper-side layout plumbing only;
    # |x1-x2| itself is fused into the stage-1 kernel).
    x1 = jnp.transpose(x1_nchw, (0, 2, 3, 1)).reshape(b, h, w * cin)
    x2 = jnp.transpose(x2_nchw, (0, 2, 3, 1)).reshape(b, h, w * cin)

    # Per-stage output widths/heights and fused (pool + 1x1 conv) weights.
    widths = [w]
    heights = [h]
    for s in STAGE_STRIDES:
        widths.append(widths[-1] // s)
        heights.append(heights[-1] // s)

    big_w, big_b = [], []
    for i in range(4):
        w_mat, b_vec = params["stages"][i]
        big_w.append(_fused_stage_weight(w_mat, STAGE_STRIDES[i], widths[i + 1]))
        big_b.append(_fused_bias(b_vec, widths[i + 1]))

    # Classifier fused with the GAP normalization and the wo4-tiling.
    w_cls_big = (jnp.tile(params["classifier_w"], (widths[4], 1))
                 / float(heights[4] * widths[4]))

    # Stage 1: fused |x1-x2| + 4x4 avg-pool + 1x1 conv + ReLU (lane-dense out).
    feat1 = encoder_stage1_absdiff(x1, x2, big_w[0], big_b[0],
                                   STAGE_STRIDES[0], ACT_DTYPE)

    # Stages 2-4 + adaptive_avg_pool2d((1,1)) + 1x1 classifier, fused, per batch.
    logits = encoder_tail_and_classifier(
        feat1, big_w[1], big_b[1], big_w[2], big_b[2],
        big_w[3], big_b[3], w_cls_big)

    # cls_x4.view(-1, num_classes - 1)
    return logits.reshape(-1, NUM_CLASSES - 1)


# ----------------------------------------------------------------------------
# Pure-JAX reference (same stand-in encoder, incl. the bf16 storage rounding)
# ----------------------------------------------------------------------------

def _reference_forward(params, x1_nchw, x2_nchw):
    hp = jax.lax.Precision.HIGHEST
    x1 = jnp.transpose(x1_nchw, (0, 2, 3, 1)).astype(jnp.float32)
    x2 = jnp.transpose(x2_nchw, (0, 2, 3, 1)).astype(jnp.float32)
    feat = jnp.abs(x1 - x2)
    for i, s in enumerate(STAGE_STRIDES):
        w_mat, b_vec = params["stages"][i]
        bb, hh, ww, cc = feat.shape
        pooled = feat.reshape(bb, hh // s, s, ww // s, s, cc).mean(axis=(2, 4))
        feat = jnp.maximum(
            jnp.einsum("bhwc,cd->bhwd", pooled, w_mat, precision=hp) + b_vec, 0.0)
        if i == 0:
            feat = feat.astype(ACT_DTYPE).astype(jnp.float32)  # mimic bf16 storage
    gap = feat.mean(axis=(1, 2))                               # (B, C4)
    return jnp.dot(gap, params["classifier_w"], precision=hp)  # (B, K)


# ----------------------------------------------------------------------------
# Main
# ----------------------------------------------------------------------------

if __name__ == "__main__":
    key = jax.random.PRNGKey(0)
    k1, k2, kp = jax.random.split(key, 3)

    B, C_in, H, W = 2, 3, 64, 64          # NCHW, matching the PyTorch convention
    x1 = jax.random.normal(k1, (B, C_in, H, W), jnp.float32)
    x2 = jax.random.normal(k2, (B, C_in, H, W), jnp.float32)

    params = init_params(kp, c_in=C_in)

    fwd = jax.jit(transwcd_single_forward)
    out = jax.block_until_ready(fwd(params, x1, x2))

    assert out.shape == (B, NUM_CLASSES - 1), out.shape
    assert bool(jnp.all(jnp.isfinite(out)))

    ref = _reference_forward(params, x1, x2)
    assert bool(jnp.allclose(out, ref, rtol=5e-2, atol=5e-2)), (out, ref)

    print("KERNEL_OK")
</pallas_src>

<mosaic_0001>
module attributes {stable_mosaic.version = 11 : i64} {
  func.func @kernel(%arg0: i32, %arg1: i32, %arg2: memref<1x64x192xf32, #tpu.memory_space<vmem>>, %arg3: memref<1x64x192xf32, #tpu.memory_space<vmem>>, %arg4: memref<192x128xf32, #tpu.memory_space<vmem>>, %arg5: memref<1x128xf32, #tpu.memory_space<vmem>>, %arg6: memref<1x16x128xbf16, #tpu.memory_space<vmem>>) attributes {dimension_semantics = [#tpu.dimension_semantics<parallel>, #tpu.dimension_semantics<parallel>], iteration_bounds = array<i64: 2, 1>, scalar_prefetch = 0 : i64, scratch_operands = 0 : i64, tpu.core_type = #tpu.core_type<tc>, window_params = [{transform_indices = @transform_0, window_bounds = array<i64: 1, 64, 192>}, {transform_indices = @transform_1, window_bounds = array<i64: 1, 64, 192>}, {pipeline_mode = #tpu.pipeline_mode<synchronous>, transform_indices = @transform_2, window_bounds = array<i64: 192, 128>}, {pipeline_mode = #tpu.pipeline_mode<synchronous>, transform_indices = @transform_3, window_bounds = array<i64: 1, 128>}, {transform_indices = @transform_4, window_bounds = array<i64: 1, 16, 128>}]} {
    %c0 = arith.constant 0 : index
    %c0_0 = arith.constant 0 : index
    %c0_1 = arith.constant 0 : index
    %0 = vector.load %arg2[%c0, %c0_0, %c0_1] : memref<1x64x192xf32, #tpu.memory_space<vmem>>, vector<1x64x192xf32>
    %1 = vector.shape_cast %0 : vector<1x64x192xf32> to vector<64x192xf32>
    %c0_2 = arith.constant 0 : index
    %c0_3 = arith.constant 0 : index
    %c0_4 = arith.constant 0 : index
    %2 = vector.load %arg3[%c0_2, %c0_3, %c0_4] : memref<1x64x192xf32, #tpu.memory_space<vmem>>, vector<1x64x192xf32>
    %3 = vector.shape_cast %2 : vector<1x64x192xf32> to vector<64x192xf32>
    %4 = arith.subf %1, %3 : vector<64x192xf32>
    %5 = math.absf %4 : vector<64x192xf32>
    %6 = vector.shape_cast %5 : vector<64x192xf32> to vector<16x4x192xf32>
    %cst = arith.constant dense<0.000000e+00> : vector<16x192xf32>
    %7 = vector.multi_reduction <add>, %6, %cst [1] : vector<16x4x192xf32> to vector<16x192xf32>
    %c0_5 = arith.constant 0 : index
    %c0_6 = arith.constant 0 : index
    %8 = vector.load %arg4[%c0_5, %c0_6] : memref<192x128xf32, #tpu.memory_space<vmem>>, vector<192x128xf32>
    %cst_7 = arith.constant dense<0.000000e+00> : vector<16x128xf32>
    %9 = tpu.matmul %7, %8, %cst_7 {dimension_numbers = #tpu.dot_dimension_numbers<[1], [0], [0], [1], [0, 0, 1, 1], [], []>} : vector<16x192xf32>, vector<192x128xf32>, vector<16x128xf32> -> vector<16x128xf32>
    %c0_8 = arith.constant 0 : index
    %c0_9 = arith.constant 0 : index
    %10 = vector.load %arg5[%c0_8, %c0_9] : memref<1x128xf32, #tpu.memory_space<vmem>>, vector<1x128xf32>
    %11 = vector.broadcast %10 : vector<1x128xf32> to vector<16x128xf32>
    %12 = arith.addf %9, %11 : vector<16x128xf32>
    %cst_10 = arith.constant 0.000000e+00 : f32
    %13 = vector.broadcast %cst_10 : f32 to vector<16x128xf32>
    %14 = arith.maximumf %12, %13 : vector<16x128xf32>
    %15 = arith.truncf %14 : vector<16x128xf32> to vector<16x128xbf16>
    %c0_11 = arith.constant 0 : index
    %c0_12 = arith.constant 0 : index
    %c0_13 = arith.constant 0 : index
    %16 = vector.load %arg6[%c0_11, %c0_12, %c0_13] : memref<1x16x128xbf16, #tpu.memory_space<vmem>>, vector<1x16x128xbf16>
    %17 = vector.shape_cast %16 : vector<1x16x128xbf16> to vector<16x128xbf16>
    %18 = vector.shape_cast %15 : vector<16x128xbf16> to vector<1x16x128xbf16>
    tpu.vector_store %arg6[%c0_11, %c0_12, %c0_13], %18 {strides = array<i32>} : memref<1x16x128xbf16, #tpu.memory_space<vmem>>, vector<1x16x128xbf16>,
    return
  }
  func.func @transform_0(%arg0: i32, %arg1: i32) -> (i32, i32, i32) {
    %c0_i32 = arith.constant 0 : i32
    %c0_i32_0 = arith.constant 0 : i32
    return %arg0, %arg1, %c0_i32 : i32, i32, i32
  }
  func.func @transform_1(%arg0: i32, %arg1: i32) -> (i32, i32, i32) {
    %c0_i32 = arith.constant 0 : i32
    %c0_i32_0 = arith.constant 0 : i32
    return %arg0, %arg1, %c0_i32 : i32, i32, i32
  }
  func.func @transform_2(%arg0: i32, %arg1: i32) -> (i32, i32) {
    %c0_i32 = arith.constant 0 : i32
    %c0_i32_0 = arith.constant 0 : i32
    %c0_i32_1 = arith.constant 0 : i32
    return %c0_i32, %c0_i32_0 : i32, i32
  }
  func.func @transform_3(%arg0: i32, %arg1: i32) -> (i32, i32) {
    %c0_i32 = arith.constant 0 : i32
    %c0_i32_0 = arith.constant 0 : i32
    %c0_i32_1 = arith.constant 0 : i32
    return %c0_i32, %c0_i32_0 : i32, i32
  }
  func.func @transform_4(%arg0: i32, %arg1: i32) -> (i32, i32, i32) {
    %c0_i32 = arith.constant 0 : i32
    %c0_i32_0 = arith.constant 0 : i32
    return %arg0, %arg1, %c0_i32 : i32, i32, i32
  }
}

module attributes {stable_mosaic.version = 11 : i64} {
  func.func @kernel(%arg0: i32, %arg1: memref<1x16x128xbf16, #tpu.memory_space<vmem>>, %arg2: memref<128x128xf32, #tpu.memory_space<vmem>>, %arg3: memref<1x128xf32, #tpu.memory_space<vmem>>, %arg4: memref<128x128xf32, #tpu.memory_space<vmem>>, %arg5: memref<1x128xf32, #tpu.memory_space<vmem>>, %arg6: memref<128x128xf32, #tpu.memory_space<vmem>>, %arg7: memref<1x128xf32, #tpu.memory_space<vmem>>, %arg8: memref<128x1xf32, #tpu.memory_space<vmem>>, %arg9: memref<1x1x1xf32, #tpu.memory_space<vmem>>) attributes {dimension_semantics = [#tpu.dimension_semantics<parallel>], iteration_bounds = array<i64: 2>, scalar_prefetch = 0 : i64, scratch_operands = 0 : i64, tpu.core_type = #tpu.core_type<tc>, window_params = [{transform_indices = @transform_0, window_bounds = array<i64: 1, 16, 128>}, {pipeline_mode = #tpu.pipeline_mode<synchronous>, transform_indices = @transform_1, window_bounds = array<i64: 128, 128>}, {pipeline_mode = #tpu.pipeline_mode<synchronous>, transform_indices = @transform_2, window_bounds = array<i64: 1, 128>}, {pipeline_mode = #tpu.pipeline_mode<synchronous>, transform_indices = @transform_3, window_bounds = array<i64: 128, 128>}, {pipeline_mode = #tpu.pipeline_mode<synchronous>, transform_indices = @transform_4, window_bounds = array<i64: 1, 128>}, {pipeline_mode = #tpu.pipeline_mode<synchronous>, transform_indices = @transform_5, window_bounds = array<i64: 128, 128>}, {pipeline_mode = #tpu.pipeline_mode<synchronous>, transform_indices = @transform_6, window_bounds = array<i64: 1, 128>}, {pipeline_mode = #tpu.pipeline_mode<synchronous>, transform_indices = @transform_7, window_bounds = array<i64: 128, 1>}, {transform_indices = @transform_8, window_bounds = array<i64: 1, 1, 1>}]} {
    %c0 = arith.constant 0 : index
    %c0_0 = arith.constant 0 : index
    %c0_1 = arith.constant 0 : index
    %0 = vector.load %arg1[%c0, %c0_0, %c0_1] : memref<1x16x128xbf16, #tpu.memory_space<vmem>>, vector<1x16x128xbf16>
    %1 = vector.shape_cast %0 : vector<1x16x128xbf16> to vector<16x128xbf16>
    %2 = arith.extf %1 : vector<16x128xbf16> to vector<16x128xf32>
    %3 = vector.shape_cast %2 : vector<16x128xf32> to vector<8x2x128xf32>
    %cst = arith.constant dense<0.000000e+00> : vector<8x128xf32>
    %4 = vector.multi_reduction <add>, %3, %cst [1] : vector<8x2x128xf32> to vector<8x128xf32>
    %c0_2 = arith.constant 0 : index
    %c0_3 = arith.constant 0 : index
    %5 = vector.load %arg2[%c0_2, %c0_3] : memref<128x128xf32, #tpu.memory_space<vmem>>, vector<128x128xf32>
    %cst_4 = arith.constant dense<0.000000e+00> : vector<8x128xf32>
    %6 = tpu.matmul %4, %5, %cst_4 {dimension_numbers = #tpu.dot_dimension_numbers<[1], [0], [0], [1], [0, 0, 1, 1], [], []>} : vector<8x128xf32>, vector<128x128xf32>, vector<8x128xf32> -> vector<8x128xf32>
    %c0_5 = arith.constant 0 : index
    %c0_6 = arith.constant 0 : index
    %7 = vector.load %arg3[%c0_5, %c0_6] : memref<1x128xf32, #tpu.memory_space<vmem>>, vector<1x128xf32>
    %8 = vector.broadcast %7 : vector<1x128xf32> to vector<8x128xf32>
    %9 = arith.addf %6, %8 : vector<8x128xf32>
    %cst_7 = arith.constant 0.000000e+00 : f32
    %10 = vector.broadcast %cst_7 : f32 to vector<8x128xf32>
    %11 = arith.maximumf %9, %10 : vector<8x128xf32>
    %12 = vector.shape_cast %11 : vector<8x128xf32> to vector<4x2x128xf32>
    %cst_8 = arith.constant dense<0.000000e+00> : vector<4x128xf32>
    %13 = vector.multi_reduction <add>, %12, %cst_8 [1] : vector<4x2x128xf32> to vector<4x128xf32>
    %c0_9 = arith.constant 0 : index
    %c0_10 = arith.constant 0 : index
    %14 = vector.load %arg4[%c0_9, %c0_10] : memref<128x128xf32, #tpu.memory_space<vmem>>, vector<128x128xf32>
    %cst_11 = arith.constant dense<0.000000e+00> : vector<4x128xf32>
    %15 = tpu.matmul %13, %14, %cst_11 {dimension_numbers = #tpu.dot_dimension_numbers<[1], [0], [0], [1], [0, 0, 1, 1], [], []>} : vector<4x128xf32>, vector<128x128xf32>, vector<4x128xf32> -> vector<4x128xf32>
    %c0_12 = arith.constant 0 : index
    %c0_13 = arith.constant 0 : index
    %16 = vector.load %arg5[%c0_12, %c0_13] : memref<1x128xf32, #tpu.memory_space<vmem>>, vector<1x128xf32>
    %17 = vector.broadcast %16 : vector<1x128xf32> to vector<4x128xf32>
    %18 = arith.addf %15, %17 : vector<4x128xf32>
    %cst_14 = arith.constant 0.000000e+00 : f32
    %19 = vector.broadcast %cst_14 : f32 to vector<4x128xf32>
    %20 = arith.maximumf %18, %19 : vector<4x128xf32>
    %21 = vector.shape_cast %20 : vector<4x128xf32> to vector<2x2x128xf32>
    %cst_15 = arith.constant dense<0.000000e+00> : vector<2x128xf32>
    %22 = vector.multi_reduction <add>, %21, %cst_15 [1] : vector<2x2x128xf32> to vector<2x128xf32>
    %c0_16 = arith.constant 0 : index
    %c0_17 = arith.constant 0 : index
    %23 = vector.load %arg6[%c0_16, %c0_17] : memref<128x128xf32, #tpu.memory_space<vmem>>, vector<128x128xf32>
    %cst_18 = arith.constant dense<0.000000e+00> : vector<2x128xf32>
    %24 = tpu.matmul %22, %23, %cst_18 {dimension_numbers = #tpu.dot_dimension_numbers<[1], [0], [0], [1], [0, 0, 1, 1], [], []>} : vector<2x128xf32>, vector<128x128xf32>, vector<2x128xf32> -> vector<2x128xf32>
    %c0_19 = arith.constant 0 : index
    %c0_20 = arith.constant 0 : index
    %25 = vector.load %arg7[%c0_19, %c0_20] : memref<1x128xf32, #tpu.memory_space<vmem>>, vector<1x128xf32>
    %26 = vector.broadcast %25 : vector<1x128xf32> to vector<2x128xf32>
    %27 = arith.addf %24, %26 : vector<2x128xf32>
    %cst_21 = arith.constant 0.000000e+00 : f32
    %28 = vector.broadcast %cst_21 : f32 to vector<2x128xf32>
    %29 = arith.maximumf %27, %28 : vector<2x128xf32>
    %cst_22 = arith.constant dense<0.000000e+00> : vector<128xf32>
    %30 = vector.multi_reduction <add>, %29, %cst_22 [0] : vector<2x128xf32> to vector<128xf32>
    %31 = vector.shape_cast %30 : vector<128xf32> to vector<1x128xf32>
    %c0_23 = arith.constant 0 : index
    %c0_24 = arith.constant 0 : index
    %32 = vector.load %arg8[%c0_23, %c0_24] : memref<128x1xf32, #tpu.memory_space<vmem>>, vector<128x1xf32>
    %cst_25 = arith.constant dense<0.000000e+00> : vector<1x1xf32>
    %33 = tpu.matmul %31, %32, %cst_25 {dimension_numbers = #tpu.dot_dimension_numbers<[1], [0], [0], [1], [0, 0, 1, 1], [], []>} : vector<1x128xf32>, vector<128x1xf32>, vector<1x1xf32> -> vector<1x1xf32>
    %c0_26 = arith.constant 0 : index
    %c0_27 = arith.constant 0 : index
    %c0_28 = arith.constant 0 : index
    %34 = vector.load %arg9[%c0_26, %c0_27, %c0_28] : memref<1x1x1xf32, #tpu.memory_space<vmem>>, vector<1x1x1xf32>
    %35 = vector.shape_cast %34 : vector<1x1x1xf32> to vector<1x1xf32>
    %36 = vector.shape_cast %33 : vector<1x1xf32> to vector<1x1x1xf32>
    tpu.vector_store %arg9[%c0_26, %c0_27, %c0_28], %36 {strides = array<i32>} : memref<1x1x1xf32, #tpu.memory_space<vmem>>, vector<1x1x1xf32>,
    return
  }
  func.func @transform_0(%arg0: i32) -> (i32, i32, i32) {
    %c0_i32 = arith.constant 0 : i32
    %c0_i32_0 = arith.constant 0 : i32
    %c0_i32_1 = arith.constant 0 : i32
    return %arg0, %c0_i32, %c0_i32_0 : i32, i32, i32
  }
  func.func @transform_1(%arg0: i32) -> (i32, i32) {
    %c0_i32 = arith.constant 0 : i32
    %c0_i32_0 = arith.constant 0 : i32
    %c0_i32_1 = arith.constant 0 : i32
    return %c0_i32, %c0_i32_0 : i32, i32
  }
  func.func @transform_2(%arg0: i32) -> (i32, i32) {
    %c0_i32 = arith.constant 0 : i32
    %c0_i32_0 = arith.constant 0 : i32
    %c0_i32_1 = arith.constant 0 : i32
    return %c0_i32, %c0_i32_0 : i32, i32
  }
  func.func @transform_3(%arg0: i32) -> (i32, i32) {
    %c0_i32 = arith.constant 0 : i32
    %c0_i32_0 = arith.constant 0 : i32
    %c0_i32_1 = arith.constant 0 : i32
    return %c0_i32, %c0_i32_0 : i32, i32
  }
  func.func @transform_4(%arg0: i32) -> (i32, i32) {
    %c0_i32 = arith.constant 0 : i32
    %c0_i32_0 = arith.constant 0 : i32
    %c0_i32_1 = arith.constant 0 : i32
    return %c0_i32, %c0_i32_0 : i32, i32
  }
  func.func @transform_5(%arg0: i32) -> (i32, i32) {
    %c0_i32 = arith.constant 0 : i32
    %c0_i32_0 = arith.constant 0 : i32
    %c0_i32_1 = arith.constant 0 : i32
    return %c0_i32, %c0_i32_0 : i32, i32
  }
  func.func @transform_6(%arg0: i32) -> (i32, i32) {
    %c0_i32 = arith.constant 0 : i32
    %c0_i32_0 = arith.constant 0 : i32
    %c0_i32_1 = arith.constant 0 : i32
    return %c0_i32, %c0_i32_0 : i32, i32
  }
  func.func @transform_7(%arg0: i32) -> (i32, i32) {
    %c0_i32 = arith.constant 0 : i32
    %c0_i32_0 = arith.constant 0 : i32
    %c0_i32_1 = arith.constant 0 : i32
    return %c0_i32, %c0_i32_0 : i32, i32
  }
  func.func @transform_8(%arg0: i32) -> (i32, i32, i32) {
    %c0_i32 = arith.constant 0 : i32
    %c0_i32_0 = arith.constant 0 : i32
    %c0_i32_1 = arith.constant 0 : i32
    return %arg0, %c0_i32, %c0_i32_0 : i32, i32, i32
  }
}

</mosaic_0001>

<llo_original>
// kernel: tile.28
$region0: #{tile.28}
  #allocation0 [shape = 's32[1]{0}', space=sflag, size = 0x4, scoped, tag = 'scoped memory for tile.28']
  %s0 = inlined_call_operand.vmem [shape: f32[8], index: 0, kind: input, shape index: {}]
  %s1 = inlined_call_operand.vmem [shape: f32[16,8], index: 1, kind: output, shape index: {}]
  // Predicated region
  $region2: #{tile.28} parent=0 // pred_check
    _
  $region3: #{tile.28} parent=0 // pred_check_branch
    %3 = sbr.rel (0) target = $region5
  $region4: #{tile.28} parent=0 // pred_region
    _
  $region5: #{tile.28} parent=0 // pred_fallthru
    _
  %v4 = vld [vmem:[%s0] ss:$0 sm:$0xff]
  %5 = vst [vmem:[%s1] sm:$0xff] %v4
  %s6 = scalar_lea.vmem %s1, 8
  %7 = vst [vmem:[%s6] sm:$0xff] %v4

// kernel: tile.29
$region0: #{tile.29}
  %s0 = inlined_call_operand.vmem [shape: f32[16,8], index: 0, kind: input, shape index: {}]
  %s1 = inlined_call_operand.vmem [shape: f32[1,128], index: 1, kind: output, shape index: {}]
  $region1: #{tile.29} parent=0
    #allocation0 [shape = 'u8[4096]{0}', space=vmem, size = 0x1000, scoped, tag = 'scoped mem for output reshape']
    %v2 = vld [vmem:[%s0] sm:$0x1]
    %vm3 = vcmask 64512
    %4 = vst.msk [vmem:[#allocation0] sm:$0x1] %vm3, %v2
    %s5 = scalar_lea.vmem %s0, 15
    %v6 = vld [vmem:[%s5] sm:$0x1]
    %7 = vrot.lane.b32.xlu0 %v6, 120
    %v8 = vpop.permute.xlu0 %7
    %vm9 = vcmask 1048512
    %10 = vst.msk [vmem:[#allocation0] sm:$0x1] %vm9, %v8
    %s11 = scalar_lea.vmem %s0, 14
    %v12 = vld [vmem:[%s11] sm:$0x1]
    %13 = vrot.lane.b32.xlu0 %v12, 112
    %v14 = vpop.permute.xlu0 %13
    %vm15 = vcmask 982912
    %16 = vst.msk [vmem:[#allocation0] sm:$0x1] %vm15, %v14
    %s17 = scalar_lea.vmem %s0, 13
    %v18 = vld [vmem:[%s17] sm:$0x1]
    %19 = vrot.lane.b32.xlu0 %v18, 104
    %v20 = vpop.permute.xlu0 %19
    %vm21 = vcmask 917312
    %22 = vst.msk [vmem:[#allocation0] sm:$0x1] %vm21, %v20
    %s23 = scalar_lea.vmem %s0, 12
    %v24 = vld [vmem:[%s23] sm:$0x1]
    %25 = vrot.lane.b32.xlu0 %v24, 96
    %v26 = vpop.permute.xlu0 %25
    %vm27 = vcmask 851712
    %28 = vst.msk [vmem:[#allocation0] sm:$0x1] %vm27, %v26
    %s29 = scalar_lea.vmem %s0, 11
    %v30 = vld [vmem:[%s29] sm:$0x1]
    %31 = vrot.lane.b32.xlu0 %v30, 88
    %v32 = vpop.permute.xlu0 %31
    %vm33 = vcmask 786112
    %34 = vst.msk [vmem:[#allocation0] sm:$0x1] %vm33, %v32
    %s35 = scalar_lea.vmem %s0, 10
    %v36 = vld [vmem:[%s35] sm:$0x1]
    %37 = vrot.lane.b32.xlu0 %v36, 80
    %v38 = vpop.permute.xlu0 %37
    %vm39 = vcmask 720512
    %40 = vst.msk [vmem:[#allocation0] sm:$0x1] %vm39, %v38
    %s41 = scalar_lea.vmem %s0, 9
    %v42 = vld [vmem:[%s41] sm:$0x1]
    %43 = vrot.lane.b32.xlu0 %v42, 72
    %v44 = vpop.permute.xlu0 %43
    %vm45 = vcmask 654912
    %46 = vst.msk [vmem:[#allocation0] sm:$0x1] %vm45, %v44
    %s47 = scalar_lea.vmem %s0, 8
    %v48 = vld [vmem:[%s47] sm:$0x1]
    %49 = vrot.lane.b32.xlu0 %v48, 64
    %v50 = vpop.permute.xlu0 %49
    %vm51 = vcmask 589312
    %52 = vst.msk [vmem:[#allocation0] sm:$0x1] %vm51, %v50
    %s53 = scalar_lea.vmem %s0, 7
    %v54 = vld [vmem:[%s53] sm:$0x1]
    %55 = vrot.lane.b32.xlu0 %v54, 56
    %v56 = vpop.permute.xlu0 %55
    %vm57 = vcmask 523712
    %58 = vst.msk [vmem:[#allocation0] sm:$0x1] %vm57, %v56
    %s59 = scalar_lea.vmem %s0, 6
    %v60 = vld [vmem:[%s59] sm:$0x1]
    %61 = vrot.lane.b32.xlu0 %v60, 48
    %v62 = vpop.permute.xlu0 %61
    %vm63 = vcmask 458112
    %64 = vst.msk [vmem:[#allocation0] sm:$0x1] %vm63, %v62
    %s65 = scalar_lea.vmem %s0, 5
    %v66 = vld [vmem:[%s65] sm:$0x1]
    %67 = vrot.lane.b32.xlu0 %v66, 40
    %v68 = vpop.permute.xlu0 %67
    %vm69 = vcmask 392512
    %70 = vst.msk [vmem:[#allocation0] sm:$0x1] %vm69, %v68
    %s71 = scalar_lea.vmem %s0, 4
    %v72 = vld [vmem:[%s71] sm:$0x1]
    %73 = vrot.lane.b32.xlu0 %v72, 32
    %v74 = vpop.permute.xlu0 %73
    %vm75 = vcmask 326912
    %76 = vst.msk [vmem:[#allocation0] sm:$0x1] %vm75, %v74
    %s77 = scalar_lea.vmem %s0, 3
    %v78 = vld [vmem:[%s77] sm:$0x1]
    %79 = vrot.lane.b32.xlu0 %v78, 24
    %v80 = vpop.permute.xlu0 %79
    %vm81 = vcmask 261312
    %82 = vst.msk [vmem:[#allocation0] sm:$0x1] %vm81, %v80
    %s83 = scalar_lea.vmem %s0, 2
    %v84 = vld [vmem:[%s83] sm:$0x1]
    %85 = vrot.lane.b32.xlu0 %v84, 16
    %v86 = vpop.permute.xlu0 %85
    %vm87 = vcmask 195712
    %88 = vst.msk [vmem:[#allocation0] sm:$0x1] %vm87, %v86
    %s89 = scalar_lea.vmem %s0, 1
    %v90 = vld [vmem:[%s89] sm:$0x1]
    %91 = vrot.lane.b32.xlu0 %v90, 8
    %v92 = vpop.permute.xlu0 %91
    %vm93 = vcmask 130112
    %94 = vst.msk [vmem:[#allocation0] sm:$0x1] %vm93, %v92
    %s96 = sshllo.u32 0, 1
    %v98 = vld [vmem:[#allocation0] sm:%s96]
    %s99 = sshllo.u32 0, 1
    %100 = vst [vmem:[%s1] sm:%s99] %v98

// kernel: transwcd_single_forward.2
$region0: #{transwcd_single_forward.2}
  #allocation0 [shape = 'u32[]', space=smem, size = 0x4, offset = 0x4, fixed_abs, tag = 'smem constant byte address 0x4 - core index']
  #allocation1 [shape = 'u32[144,128]{1,0:T(1,128)}', space=vmem, size = 0x12000, scoped, tag = 'internal scratch']
  %s0 = inlined_call_operand.vmem [shape: f32[2,64,192], index: 0, kind: input, shape index: {}]
  %s1 = inlined_call_operand.vmem [shape: f32[2,64,192], index: 1, kind: input, shape index: {}]
  %s2 = inlined_call_operand.vmem [shape: f32[192,128], index: 2, kind: input, shape index: {}]
  %s3 = inlined_call_operand.vmem [shape: f32[1,128], index: 3, kind: input, shape index: {}]
  %s4 = inlined_call_operand.vmem [shape: bf16[2,16,128], index: 4, kind: output, shape index: {}]
  %s5 = sld [smem:[#allocation0]]
  $region49: #{transwcd_single_forward.2} parent=0
    _
  %s7 = ssub.s32 1, %s5
  %s8 = scalar_select 0, %s7, %s5
  loop: start=0, step=1, limit=4
  $region2: #{transwcd_single_forward.2} parent=0 // loop_pre_header
    _
  $region3: #{transwcd_single_forward.2} parent=0 // loop_header
    %s10 = sphi 0, %s14
    %p11 = scmp.ge.s32.totalorder %s10, 4
    %s17 = sphi 0, %s29
    %s18 = sphi 0, %s25
    %s19 = sphi 0, %s17
    %s20 = sphi 0, %s18
    %s21 = sphi 0, %s19
    %s22 = sphi 0, %s20
    %s34 = sphi 0, %s36
    %s37 = sphi 0, %s34
    %s38 = sphi 0, %s37
    %s54 = sphi 0, %s38
    %s62 = sphi 0, %s64
    %s65 = sphi 0, %s62
    %s66 = sphi 0, %s65
    %s82 = sphi 0, %s66
    %s86 = sphi 0, %s86
    %s88 = sphi 0, %s86
    %s89 = sphi 0, %s88
    %s103 = sphi 0, %s89
    %s107 = sphi 0, %s107
    %s109 = sphi 0, %s107
    %s110 = sphi 0, %s109
    %s124 = sphi 0, %s110
    %s132 = sphi 0, %s134
    %s135 = sphi 0, %s132
    %s136 = sphi 0, %s135
    %s152 = sphi 0, %s136
  $region4: #{transwcd_single_forward.2} parent=0 // loop_header_branch
    %13 = sbr.rel (%p11) target = $region8
  $region5: #{transwcd_single_forward.2} parent=0 // loop_body
    %s15 = ssub.s32 %s10, 1
    %s16 = ssub.s32 %s10, 2
    %s23 = sadd.s32 1, %s18
    %p24 = scmp.ge.s32.totalorder %s23, 1
    %s25 = scalar_select %p24, 0, %s23
    %s26 = sadd.s32 1, %s17
    %s27 = scalar_select %p24, %s26, %s17
    %p28 = scmp.ge.s32.totalorder %s27, 2
    %s29 = scalar_select %p28, 0, %s27
    %s30 = ssub.s32 %s17, %s29
    %s31 = ssub.s32 %s18, %s25
    %s32 = sor.u32 %s30, %s31
    %p33 = scmp.eq.s32.totalorder %s32, 0
    %s35 = sadd.s32 %s34, 1
    %s36 = scalar_select %p33, %s34, %s35
    %p39 = pneg %p33
    %p40 = scmp.eq.s32.totalorder %s10, 1
    %p41 = por %p39, %p40
    %p42 = scmp.ne.s32.totalorder %s34, %s37
    %p43 = scmp.eq.s32.totalorder %s10, 0
    %p44 = por %p42, %p43
    %p45 = scmp.ne.s32.totalorder %s34, %s37
    %p46 = scmp.eq.s32.totalorder %s15, 1
    %p47 = por %p45, %p46
    %p48 = scmp.ne.s32.totalorder %s37, %s38
    %p49 = scmp.eq.s32.totalorder %s15, 0
    %p50 = por %p48, %p49
    %p51 = scmp.ne.s32.totalorder %s37, %s38
    %p52 = scmp.eq.s32.totalorder %s16, 1
    %p53 = por %p51, %p52
    %p55 = scmp.ne.s32.totalorder %s38, %s54
    %p56 = scmp.eq.s32.totalorder %s16, 0
    %p57 = por %p55, %p56
    %s58 = ssub.s32 %s17, %s29
    %s59 = ssub.s32 %s18, %s25
    %s60 = sor.u32 %s58, %s59
    %p61 = scmp.eq.s32.totalorder %s60, 0
    %s63 = sadd.s32 %s62, 1
    %s64 = scalar_select %p61, %s62, %s63
    %p67 = pneg %p61
    %p68 = scmp.eq.s32.totalorder %s10, 1
    %p69 = por %p67, %p68
    %p70 = scmp.ne.s32.totalorder %s62, %s65
    %p71 = scmp.eq.s32.totalorder %s10, 0
    %p72 = por %p70, %p71
    %p73 = scmp.ne.s32.totalorder %s62, %s65
    %p74 = scmp.eq.s32.totalorder %s15, 1
    %p75 = por %p73, %p74
    %p76 = scmp.ne.s32.totalorder %s65, %s66
    %p77 = scmp.eq.s32.totalorder %s15, 0
    %p78 = por %p76, %p77
    %p79 = scmp.ne.s32.totalorder %s65, %s66
    %p80 = scmp.eq.s32.totalorder %s16, 1
    %p81 = por %p79, %p80
    %p83 = scmp.ne.s32.totalorder %s66, %s82
    %p84 = scmp.eq.s32.totalorder %s16, 0
    %p85 = por %p83, %p84
    %s87 = sadd.s32 %s86, 1
    %p90 = scmp.eq.s32.totalorder %s10, 1
    %p91 = scmp.ne.s32.totalorder %s86, %s88
    %p92 = scmp.eq.s32.totalorder %s10, 0
    %p93 = por %p91, %p92
    %p94 = scmp.ne.s32.totalorder %s86, %s88
    %p95 = scmp.eq.s32.totalorder %s15, 1
    %p96 = por %p94, %p95
    %p97 = scmp.ne.s32.totalorder %s88, %s89
    %p98 = scmp.eq.s32.totalorder %s15, 0
    %p99 = por %p97, %p98
    %p100 = scmp.ne.s32.totalorder %s88, %s89
    %p101 = scmp.eq.s32.totalorder %s16, 1
    %p102 = por %p100, %p101
    %p104 = scmp.ne.s32.totalorder %s89, %s103
    %p105 = scmp.eq.s32.totalorder %s16, 0
    %p106 = por %p104, %p105
    %s108 = sadd.s32 %s107, 1
    %p111 = scmp.eq.s32.totalorder %s10, 1
    %p112 = scmp.ne.s32.totalorder %s107, %s109
    %p113 = scmp.eq.s32.totalorder %s10, 0
    %p114 = por %p112, %p113
    %p115 = scmp.ne.s32.totalorder %s107, %s109
    %p116 = scmp.eq.s32.totalorder %s15, 1
    %p117 = por %p115, %p116
    %p118 = scmp.ne.s32.totalorder %s109, %s110
    %p119 = scmp.eq.s32.totalorder %s15, 0
    %p120 = por %p118, %p119
    %p121 = scmp.ne.s32.totalorder %s109, %s110
    %p122 = scmp.eq.s32.totalorder %s16, 1
    %p123 = por %p121, %p122
    %p125 = scmp.ne.s32.totalorder %s110, %s124
    %p126 = scmp.eq.s32.totalorder %s16, 0
    %p127 = por %p125, %p126
    %s128 = ssub.s32 %s17, %s29
    %s129 = ssub.s32 %s18, %s25
    %s130 = sor.u32 %s128, %s129
    %p131 = scmp.eq.s32.totalorder %s130, 0
    %s133 = sadd.s32 %s132, 1
    %s134 = scalar_select %p131, %s132, %s133
    %p137 = pneg %p131
    %p138 = scmp.eq.s32.totalorder %s10, 1
    %p139 = por %p137, %p138
    %p140 = scmp.ne.s32.totalorder %s132, %s135
    %p141 = scmp.eq.s32.totalorder %s10, 0
    %p142 = por %p140, %p141
    %p143 = scmp.ne.s32.totalorder %s132, %s135
    %p144 = scmp.eq.s32.totalorder %s15, 1
    %p145 = por %p143, %p144
    %p146 = scmp.ne.s32.totalorder %s135, %s136
    %p147 = scmp.eq.s32.totalorder %s15, 0
    %p148 = por %p146, %p147
    %p149 = scmp.ne.s32.totalorder %s135, %s136
    %p150 = scmp.eq.s32.totalorder %s16, 1
    %p151 = por %p149, %p150
    %p153 = scmp.ne.s32.totalorder %s136, %s152
    %p154 = scmp.eq.s32.totalorder %s16, 0
    %p155 = por %p153, %p154
    %p156 = scmp.le.s32.totalorder 1, %s10
    %p157 = scmp.lt.s32.totalorder %s10, 3
    %p158 = pnand %p156, %p157
    %p159 = pneg %p158
    // Predicated region
    $region9: #{transwcd_single_forward.2} parent=5 // pred_check
      _
    $region10: #{transwcd_single_forward.2} parent=5 // pred_check_branch
      %161 = sbr.rel (%p158) target = $region12
    $region11: #{transwcd_single_forward.2} parent=5 // pred_region
      %s162 = ssub.s32 %s10, 1
      // Predicated region
      $region13: #{transwcd_single_forward.2} parent=11 // pred_check
        %p163 = pneg %p99
      $region14: #{transwcd_single_forward.2} parent=11 // pred_check_branch
        %165 = sbr.rel (%p163) target = $region16
      $region15: #{transwcd_single_forward.2} parent=11 // pred_region
        _
      $region16: #{transwcd_single_forward.2} parent=11 // pred_fallthru
        _
      // Predicated region
      $region17: #{transwcd_single_forward.2} parent=11 // pred_check
        %p166 = pneg %p120
      $region18: #{transwcd_single_forward.2} parent=11 // pred_check_branch
        %168 = sbr.rel (%p166) target = $region20
      $region19: #{transwcd_single_forward.2} parent=11 // pred_region
        _
      $region20: #{transwcd_single_forward.2} parent=11 // pred_fallthru
        _
    $region12: #{transwcd_single_forward.2} parent=5 // pred_fallthru
      _
    %p169 = scmp.lt.s32.totalorder %s10, 2
    // Predicated region
    $region21: #{transwcd_single_forward.2} parent=5 // pred_check
      %p170 = pneg %p169
    $region22: #{transwcd_single_forward.2} parent=5 // pred_check_branch
      %172 = sbr.rel (%p170) target = $region24
    $region23: #{transwcd_single_forward.2} parent=5 // pred_region
      // Predicated region
      $region25: #{transwcd_single_forward.2} parent=23 // pred_check
        %p173 = pneg %p44
      $region26: #{transwcd_single_forward.2} parent=23 // pred_check_branch
        %175 = sbr.rel (%p173) target = $region28
      $region27: #{transwcd_single_forward.2} parent=23 // pred_region
        %s176 = smul.u32 8, %s18
        %p177 = scmp.lt.s32.totalorder %s17, 1
        %s178 = scalar_select %p177, %s17, 1
        %p179 = scmp.lt.s32.totalorder %s176, 7
        %s180 = scalar_select %p179, %s176, 7
        %s181 = smul.addr %s180, 2
        %s182 = smul.addr %s178, 16
        %s183 = sadd.s32 %s181, %s182
        %s184 = smul.addr %s183, 8
        %s185 = scalar_lea.vmem %s0, %s184
        %s186 = smul.u32 8, %s18
      $region28: #{transwcd_single_forward.2} parent=23 // pred_fallthru
        _
      // Predicated region
      $region29: #{transwcd_single_forward.2} parent=23 // pred_check
        %p187 = pneg %p72
      $region30: #{transwcd_single_forward.2} parent=23 // pred_check_branch
        %189 = sbr.rel (%p187) target = $region32
      $region31: #{transwcd_single_forward.2} parent=23 // pred_region
        %s190 = smul.u32 8, %s18
        %p191 = scmp.lt.s32.totalorder %s17, 1
        %s192 = scalar_select %p191, %s17, 1
        %p193 = scmp.lt.s32.totalorder %s190, 7
        %s194 = scalar_select %p193, %s190, 7
        %s195 = smul.addr %s194, 2
        %s196 = smul.addr %s192, 16
        %s197 = sadd.s32 %s195, %s196
        %s198 = smul.addr %s197, 8
        %s199 = scalar_lea.vmem %s1, %s198
        %s200 = smul.u32 8, %s18
      $region32: #{transwcd_single_forward.2} parent=23 // pred_fallthru
        _
    $region24: #{transwcd_single_forward.2} parent=5 // pred_fallthru
      _
    %p201 = scmp.le.s32.totalorder 1, %s10
    %p202 = scmp.lt.s32.totalorder %s10, 3
    %p203 = pnand %p201, %p202
    %p204 = pneg %p203
    // Predicated region
    $region33: #{transwcd_single_forward.2} parent=5 // pred_check
      _
    $region34: #{transwcd_single_forward.2} parent=5 // pred_check_branch
      %206 = sbr.rel (%p203) target = $region36
    $region35: #{transwcd_single_forward.2} parent=5 // pred_region
      %s207 = ssub.s32 %s10, 1
      %s208 = smul.u32 8, %s20
      %p209 = scmp.lt.s32.totalorder %s19, 1
      %s210 = scalar_select %p209, %s19, 1
      %p211 = scmp.lt.s32.totalorder %s208, 7
      %s212 = scalar_select %p211, %s208, 7
      %s213 = smul.addr %s212, 2
      %s214 = smul.addr %s210, 16
      %s215 = sadd.s32 %s213, %s214
      %s216 = smul.addr %s215, 8
      %s217 = scalar_lea.vmem %s0, %s216
      %p218 = pneg %p50
      %p219 = pneg %p47
      %s220 = smul.u32 8, %s20
      %p221 = scmp.lt.s32.totalorder %s19, 1
      %s222 = scalar_select %p221, %s19, 1
      %p223 = scmp.lt.s32.totalorder %s220, 7
      %s224 = scalar_select %p223, %s220, 7
      %s225 = smul.addr %s224, 2
      %s226 = smul.addr %s222, 16
      %s227 = sadd.s32 %s225, %s226
      %s228 = smul.addr %s227, 8
      %s229 = scalar_lea.vmem %s1, %s228
      %p230 = pneg %p78
      %p231 = pneg %p75
      %p232 = pneg %p99
      %p233 = pneg %p96
      %p234 = pneg %p120
      %p235 = pneg %p117
      %p236 = pneg %p148
      %p237 = pneg %p145
      %s238 = smul.u32 2, %s20
      %p239 = scmp.lt.s32.totalorder %s19, 1
      %s240 = scalar_select %p239, %s19, 1
      %p241 = scmp.lt.s32.totalorder %s238, 1
      %s242 = scalar_select %p241, %s238, 1
      %s243 = smul.addr %s240, 2
      %s244 = sadd.s32 %s242, %s243
      %s245 = smul.addr %s244, 4
      %s246 = scalar_lea.vmem %s4, %s245
      %s247 = smul.u32 8, %s20
      %p248 = scmp.lt.s32.totalorder %s19, 1
      %s249 = scalar_select %p248, %s19, 1
      %p250 = scmp.lt.s32.totalorder %s247, 7
      %s251 = scalar_select %p250, %s247, 7
      %s252 = smul.addr %s251, 2
      %s253 = smul.addr %s249, 16
      %s254 = sadd.s32 %s252, %s253
      %s255 = smul.addr %s254, 8
      %s256 = scalar_lea.vmem %s0, %s255
      %s257 = smul.u32 8, %s20
      %s258 = smul.u32 8, %s20
      %p259 = scmp.lt.s32.totalorder %s19, 1
      %s260 = scalar_select %p259, %s19, 1
      %p261 = scmp.lt.s32.totalorder %s258, 7
      %s262 = scalar_select %p261, %s258, 7
      %s263 = smul.addr %s262, 2
      %s264 = smul.addr %s260, 16
      %s265 = sadd.s32 %s263, %s264
      %s266 = smul.addr %s265, 8
      %s267 = scalar_lea.vmem %s1, %s266
      %s268 = smul.u32 8, %s20
      %s269 = smul.u32 2, %s20
      %p270 = scmp.lt.s32.totalorder %s19, 1
      %s271 = scalar_select %p270, %s19, 1
      %p272 = scmp.lt.s32.totalorder %s269, 1
      %s273 = scalar_select %p272, %s269, 1
      %s274 = smul.addr %s271, 2
      %s275 = sadd.s32 %s273, %s274
      %s276 = smul.addr %s275, 4
      %s277 = scalar_lea.vmem %s4, %s276
      %s278 = smul.u32 2, %s20
      %v279 = vld [vmem:[%s256] sm:$0xff]
      %v280 = vld [vmem:[%s256 + $0x8] sm:$0xff]
      %v281 = vld [vmem:[%s256 + $0x10] sm:$0xff]
      %v282 = vld [vmem:[%s256 + $0x18] sm:$0xff]
      %v283 = vld [vmem:[%s256 + $0x20] sm:$0xff]
      %v284 = vld [vmem:[%s256 + $0x28] sm:$0xff]
      %v285 = vld [vmem:[%s256 + $0x30] sm:$0xff]
      %v286 = vld [vmem:[%s256 + $0x38] sm:$0xff]
      %v287 = vld [vmem:[%s256 + $0x40] sm:$0xff]
      %v288 = vld [vmem:[%s256 + $0x48] sm:$0xff]
      %v289 = vld [vmem:[%s256 + $0x50] sm:$0xff]
      %v290 = vld [vmem:[%s256 + $0x58] sm:$0xff]
      %v291 = vld [vmem:[%s256 + $0x60] sm:$0xff]
      %v292 = vld [vmem:[%s256 + $0x68] sm:$0xff]
      %v293 = vld [vmem:[%s256 + $0x70] sm:$0xff]
      %v294 = vld [vmem:[%s256 + $0x78] sm:$0xff]
      %v295 = vld [vmem:[%s267] sm:$0xff]
      %v296 = vld [vmem:[%s267 + $0x8] sm:$0xff]
      %v297 = vld [vmem:[%s267 + $0x10] sm:$0xff]
      %v298 = vld [vmem:[%s267 + $0x18] sm:$0xff]
      %v299 = vld [vmem:[%s267 + $0x20] sm:$0xff]
      %v300 = vld [vmem:[%s267 + $0x28] sm:$0xff]
      %v301 = vld [vmem:[%s267 + $0x30] sm:$0xff]
      %v302 = vld [vmem:[%s267 + $0x38] sm:$0xff]
      %v303 = vld [vmem:[%s267 + $0x40] sm:$0xff]
      %v304 = vld [vmem:[%s267 + $0x48] sm:$0xff]
      %v305 = vld [vmem:[%s267 + $0x50] sm:$0xff]
      %v306 = vld [vmem:[%s267 + $0x58] sm:$0xff]
      %v307 = vld [vmem:[%s267 + $0x60] sm:$0xff]
      %v308 = vld [vmem:[%s267 + $0x68] sm:$0xff]
      %v309 = vld [vmem:[%s267 + $0x70] sm:$0xff]
      %v310 = vld [vmem:[%s267 + $0x78] sm:$0xff]
      %v311 = vsub.f32 %v279, %v295
      %v312 = vsub.f32 %v280, %v296
      %v313 = vsub.f32 %v281, %v297
      %v314 = vsub.f32 %v282, %v298
      %v315 = vsub.f32 %v283, %v299
      %v316 = vsub.f32 %v284, %v300
      %v317 = vsub.f32 %v285, %v301
      %v318 = vsub.f32 %v286, %v302
      %v319 = vsub.f32 %v287, %v303
      %v320 = vsub.f32 %v288, %v304
      %v321 = vsub.f32 %v289, %v305
      %v322 = vsub.f32 %v290, %v306
      %v323 = vsub.f32 %v291, %v307
      %v324 = vsub.f32 %v292, %v308
      %v325 = vsub.f32 %v293, %v309
      %v326 = vsub.f32 %v294, %v310
      %v327 = vand.u32 2147483647, %v311
      %v328 = vand.u32 2147483647, %v312
      %v329 = vand.u32 2147483647, %v313
      %v330 = vand.u32 2147483647, %v314
      %v331 = vand.u32 2147483647, %v315
      %v332 = vand.u32 2147483647, %v316
      %v333 = vand.u32 2147483647, %v317
      %v334 = vand.u32 2147483647, %v318
      %v335 = vand.u32 2147483647, %v319
      %v336 = vand.u32 2147483647, %v320
      %v337 = vand.u32 2147483647, %v321
      %v338 = vand.u32 2147483647, %v322
      %v339 = vand.u32 2147483647, %v323
      %v340 = vand.u32 2147483647, %v324
      %v341 = vand.u32 2147483647, %v325
      %v342 = vand.u32 2147483647, %v326
      %v359 = vcombine.low %v327, %v328
      %v360 = vcombine.high %v327, %v328
      %v361 = vcombine.low %v329, %v330
      %v362 = vcombine.high %v329, %v330
      %v363 = vcombine.low %v331, %v332
      %v364 = vcombine.high %v331, %v332
      %v365 = vcombine.low %v333, %v334
      %v366 = vcombine.high %v333, %v334
      %v367 = vcombine.low %v335, %v336
      %v368 = vcombine.high %v335, %v336
      %v369 = vcombine.low %v337, %v338
      %v370 = vcombine.high %v337, %v338
      %v371 = vcombine.low %v339, %v340
      %v372 = vcombine.high %v339, %v340
      %v373 = vcombine.low %v341, %v342
      %v374 = vcombine.high %v341, %v342
      %v391 = vcombine.high %v359, %v359
      %v392 = vcombine.high %v360, %v360
      %v393 = vcombine.high %v361, %v361
      %v394 = vcombine.high %v362, %v362
      %v395 = vcombine.high %v363, %v363
      %v396 = vcombine.high %v364, %v364
      %v397 = vcombine.high %v365, %v365
      %v398 = vcombine.high %v366, %v366
      %v399 = vcombine.high %v367, %v367
      %v400 = vcombine.high %v368, %v368
      %v401 = vcombine.high %v369, %v369
      %v402 = vcombine.high %v370, %v370
      %v403 = vcombine.high %v371, %v371
      %v404 = vcombine.high %v372, %v372
      %v405 = vcombine.high %v373, %v373
      %v406 = vcombine.high %v374, %v374
      %vm423 = vcmask 1043456
      %v424 = vsel %vm423, %v359, 0.0
      %v425 = vrot.slane %v424, 4
      %v426 = vadd.f32 %v424, %v425
      %v427 = vrot.slane %v426, 2
      %v428 = vadd.f32 %v426, %v427
      %v429 = vrot.slane %v428, 1
      %v430 = vadd.f32 %v428, %v429
      %vm431 = vcmask 519168
      %v432 = vsel %vm431, %v391, 0.0
      %v433 = vrot.slane %v432, 4
      %v434 = vadd.f32 %v432, %v433
      %v435 = vrot.slane %v434, 2
      %v436 = vadd.f32 %v434, %v435
      %v437 = vrot.slane %v436, 1
      %v438 = vadd.f32 %v436, %v437
      %v439 = vsel %vm423, %v360, 0.0
      %v440 = vrot.slane %v439, 4
      %v441 = vadd.f32 %v439, %v440
      %v442 = vrot.slane %v441, 2
      %v443 = vadd.f32 %v441, %v442
      %v444 = vrot.slane %v443, 1
      %v445 = vadd.f32 %v443, %v444
      %v446 = vsel %vm431, %v392, 0.0
      %v447 = vrot.slane %v446, 4
      %v448 = vadd.f32 %v446, %v447
      %v449 = vrot.slane %v448, 2
      %v450 = vadd.f32 %v448, %v449
      %v451 = vrot.slane %v450, 1
      %v452 = vadd.f32 %v450, %v451
      %v453 = vsel %vm423, %v361, 0.0
      %v454 = vrot.slane %v453, 4
      %v455 = vadd.f32 %v453, %v454
      %v456 = vrot.slane %v455, 2
      %v457 = vadd.f32 %v455, %v456
      %v458 = vrot.slane %v457, 1
      %v459 = vadd.f32 %v457, %v458
      %v460 = vsel %vm431, %v393, 0.0
      %v461 = vrot.slane %v460, 4
      %v462 = vadd.f32 %v460, %v461
      %v463 = vrot.slane %v462, 2
      %v464 = vadd.f32 %v462, %v463
      %v465 = vrot.slane %v464, 1
      %v466 = vadd.f32 %v464, %v465
      %v467 = vsel %vm423, %v362, 0.0
      %v468 = vrot.slane %v467, 4
      %v469 = vadd.f32 %v467, %v468
      %v470 = vrot.slane %v469, 2
      %v471 = vadd.f32 %v469, %v470
      %v472 = vrot.slane %v471, 1
      %v473 = vadd.f32 %v471, %v472
      %v474 = vsel %vm431, %v394, 0.0
      %v475 = vrot.slane %v474, 4
      %v476 = vadd.f32 %v474, %v475
      %v477 = vrot.slane %v476, 2
      %v478 = vadd.f32 %v476, %v477
      %v479 = vrot.slane %v478, 1
      %v480 = vadd.f32 %v478, %v479
      %v481 = vsel %vm423, %v363, 0.0
      %v482 = vrot.slane %v481, 4
      %v483 = vadd.f32 %v481, %v482
      %v484 = vrot.slane %v483, 2
      %v485 = vadd.f32 %v483, %v484
      %v486 = vrot.slane %v485, 1
      %v487 = vadd.f32 %v485, %v486
      %v488 = vsel %vm431, %v395, 0.0
      %v489 = vrot.slane %v488, 4
      %v490 = vadd.f32 %v488, %v489
      %v491 = vrot.slane %v490, 2
      %v492 = vadd.f32 %v490, %v491
      %v493 = vrot.slane %v492, 1
      %v494 = vadd.f32 %v492, %v493
      %v495 = vsel %vm423, %v364, 0.0
      %v496 = vrot.slane %v495, 4
      %v497 = vadd.f32 %v495, %v496
      %v498 = vrot.slane %v497, 2
      %v499 = vadd.f32 %v497, %v498
      %v500 = vrot.slane %v499, 1
      %v501 = vadd.f32 %v499, %v500
      %v502 = vsel %vm431, %v396, 0.0
      %v503 = vrot.slane %v502, 4
      %v504 = vadd.f32 %v502, %v503
      %v505 = vrot.slane %v504, 2
      %v506 = vadd.f32 %v504, %v505
      %v507 = vrot.slane %v506, 1
      %v508 = vadd.f32 %v506, %v507
      %v509 = vsel %vm423, %v365, 0.0
      %v510 = vrot.slane %v509, 4
      %v511 = vadd.f32 %v509, %v510
      %v512 = vrot.slane %v511, 2
      %v513 = vadd.f32 %v511, %v512
      %v514 = vrot.slane %v513, 1
      %v515 = vadd.f32 %v513, %v514
      %v516 = vsel %vm431, %v397, 0.0
      %v517 = vrot.slane %v516, 4
      %v518 = vadd.f32 %v516, %v517
      %v519 = vrot.slane %v518, 2
      %v520 = vadd.f32 %v518, %v519
      %v521 = vrot.slane %v520, 1
      %v522 = vadd.f32 %v520, %v521
      %v523 = vsel %vm423, %v366, 0.0
      %v524 = vrot.slane %v523, 4
      %v525 = vadd.f32 %v523, %v524
      %v526 = vrot.slane %v525, 2
      %v527 = vadd.f32 %v525, %v526
      %v528 = vrot.slane %v527, 1
      %v529 = vadd.f32 %v527, %v528
      %v530 = vsel %vm431, %v398, 0.0
      %v531 = vrot.slane %v530, 4
      %v532 = vadd.f32 %v530, %v531
      %v533 = vrot.slane %v532, 2
      %v534 = vadd.f32 %v532, %v533
      %v535 = vrot.slane %v534, 1
      %v536 = vadd.f32 %v534, %v535
      %v537 = vsel %vm423, %v367, 0.0
      %v538 = vrot.slane %v537, 4
      %v539 = vadd.f32 %v537, %v538
      %v540 = vrot.slane %v539, 2
      %v541 = vadd.f32 %v539, %v540
      %v542 = vrot.slane %v541, 1
      %v543 = vadd.f32 %v541, %v542
      %v544 = vsel %vm431, %v399, 0.0
      %v545 = vrot.slane %v544, 4
      %v546 = vadd.f32 %v544, %v545
      %v547 = vrot.slane %v546, 2
      %v548 = vadd.f32 %v546, %v547
      %v549 = vrot.slane %v548, 1
      %v550 = vadd.f32 %v548, %v549
      %v551 = vsel %vm423, %v368, 0.0
      %v552 = vrot.slane %v551, 4
      %v553 = vadd.f32 %v551, %v552
      %v554 = vrot.slane %v553, 2
      %v555 = vadd.f32 %v553, %v554
      %v556 = vrot.slane %v555, 1
      %v557 = vadd.f32 %v555, %v556
      %v558 = vsel %vm431, %v400, 0.0
      %v559 = vrot.slane %v558, 4
      %v560 = vadd.f32 %v558, %v559
      %v561 = vrot.slane %v560, 2
      %v562 = vadd.f32 %v560, %v561
      %v563 = vrot.slane %v562, 1
      %v564 = vadd.f32 %v562, %v563
      %v565 = vsel %vm423, %v369, 0.0
      %v566 = vrot.slane %v565, 4
      %v567 = vadd.f32 %v565, %v566
      %v568 = vrot.slane %v567, 2
      %v569 = vadd.f32 %v567, %v568
      %v570 = vrot.slane %v569, 1
      %v571 = vadd.f32 %v569, %v570
      %v572 = vsel %vm431, %v401, 0.0
      %v573 = vrot.slane %v572, 4
      %v574 = vadd.f32 %v572, %v573
      %v575 = vrot.slane %v574, 2
      %v576 = vadd.f32 %v574, %v575
      %v577 = vrot.slane %v576, 1
      %v578 = vadd.f32 %v576, %v577
      %v579 = vsel %vm423, %v370, 0.0
      %v580 = vrot.slane %v579, 4
      %v581 = vadd.f32 %v579, %v580
      %v582 = vrot.slane %v581, 2
      %v583 = vadd.f32 %v581, %v582
      %v584 = vrot.slane %v583, 1
      %v585 = vadd.f32 %v583, %v584
      %v586 = vsel %vm431, %v402, 0.0
      %v587 = vrot.slane %v586, 4
      %v588 = vadd.f32 %v586, %v587
      %v589 = vrot.slane %v588, 2
      %v590 = vadd.f32 %v588, %v589
      %v591 = vrot.slane %v590, 1
      %v592 = vadd.f32 %v590, %v591
      %v593 = vsel %vm423, %v371, 0.0
      %v594 = vrot.slane %v593, 4
      %v595 = vadd.f32 %v593, %v594
      %v596 = vrot.slane %v595, 2
      %v597 = vadd.f32 %v595, %v596
      %v598 = vrot.slane %v597, 1
      %v599 = vadd.f32 %v597, %v598
      %v600 = vsel %vm431, %v403, 0.0
      %v601 = vrot.slane %v600, 4
      %v602 = vadd.f32 %v600, %v601
      %v603 = vrot.slane %v602, 2
      %v604 = vadd.f32 %v602, %v603
      %v605 = vrot.slane %v604, 1
      %v606 = vadd.f32 %v604, %v605
      %v607 = vsel %vm423, %v372, 0.0
      %v608 = vrot.slane %v607, 4
      %v609 = vadd.f32 %v607, %v608
      %v610 = vrot.slane %v609, 2
      %v611 = vadd.f32 %v609, %v610
      %v612 = vrot.slane %v611, 1
      %v613 = vadd.f32 %v611, %v612
      %v614 = vsel %vm431, %v404, 0.0
      %v615 = vrot.slane %v614, 4
      %v616 = vadd.f32 %v614, %v615
      %v617 = vrot.slane %v616, 2
      %v618 = vadd.f32 %v616, %v617
      %v619 = vrot.slane %v618, 1
      %v620 = vadd.f32 %v618, %v619
      %v621 = vsel %vm423, %v373, 0.0
      %v622 = vrot.slane %v621, 4
      %v623 = vadd.f32 %v621, %v622
      %v624 = vrot.slane %v623, 2
      %v625 = vadd.f32 %v623, %v624
      %v626 = vrot.slane %v625, 1
      %v627 = vadd.f32 %v625, %v626
      %v628 = vsel %vm431, %v405, 0.0
      %v629 = vrot.slane %v628, 4
      %v630 = vadd.f32 %v628, %v629
      %v631 = vrot.slane %v630, 2
      %v632 = vadd.f32 %v630, %v631
      %v633 = vrot.slane %v632, 1
      %v634 = vadd.f32 %v632, %v633
      %v635 = vsel %vm423, %v374, 0.0
      %v636 = vrot.slane %v635, 4
      %v637 = vadd.f32 %v635, %v636
      %v638 = vrot.slane %v637, 2
      %v639 = vadd.f32 %v637, %v638
      %v640 = vrot.slane %v639, 1
      %v641 = vadd.f32 %v639, %v640
      %v642 = vsel %vm431, %v406, 0.0
      %v643 = vrot.slane %v642, 4
      %v644 = vadd.f32 %v642, %v643
      %v645 = vrot.slane %v644, 2
      %v646 = vadd.f32 %v644, %v645
      %v647 = vrot.slane %v646, 1
      %v648 = vadd.f32 %v646, %v647
      %v649 = vld [vmem:[%s2] sm:$0xff]
      %v650 = vld [vmem:[%s2 + $0x8] sm:$0xff]
      %v651 = vld [vmem:[%s2 + $0x10] sm:$0xff]
      %v652 = vld [vmem:[%s2 + $0x18] sm:$0xff]
      %v653 = vld [vmem:[%s2 + $0x20] sm:$0xff]
      %v654 = vld [vmem:[%s2 + $0x28] sm:$0xff]
      %v655 = vld [vmem:[%s2 + $0x30] sm:$0xff]
      %v656 = vld [vmem:[%s2 + $0x38] sm:$0xff]
      %v657 = vld [vmem:[%s2 + $0x40] sm:$0xff]
      %v658 = vld [vmem:[%s2 + $0x48] sm:$0xff]
      %v659 = vld [vmem:[%s2 + $0x50] sm:$0xff]
      %v660 = vld [vmem:[%s2 + $0x58] sm:$0xff]
      %v661 = vld [vmem:[%s2 + $0x60] sm:$0xff]
      %v662 = vld [vmem:[%s2 + $0x68] sm:$0xff]
      %v663 = vld [vmem:[%s2 + $0x70] sm:$0xff]
      %v664 = vld [vmem:[%s2 + $0x78] sm:$0xff]
      %v665 = vld [vmem:[%s2 + $0x80] sm:$0xff]
      %v666 = vld [vmem:[%s2 + $0x88] sm:$0xff]
      %v667 = vld [vmem:[%s2 + $0x90] sm:$0xff]
      %v668 = vld [vmem:[%s2 + $0x98] sm:$0xff]
      %v669 = vld [vmem:[%s2 + $0xa0] sm:$0xff]
      %v670 = vld [vmem:[%s2 + $0xa8] sm:$0xff]
      %v671 = vld [vmem:[%s2 + $0xb0] sm:$0xff]
      %v672 = vld [vmem:[%s2 + $0xb8] sm:$0xff]
      %v673 = vld [vmem:[%s3] sm:$0x1]
      %v675 = vlaneseq
      %v676 = vshrl.u32 %v675, 7
      %v677 = vsub.s32 0, %v676
      %v678 = vrot.slane %v673, %v677
      %vm712 = vcmask 1041409
      %v713 = vsel %vm712, %v445, %v430
      %vm714 = vcmask 1042434
      %v715 = vsel %vm714, %v459, %v713
      %vm716 = vcmask 1043459
      %v717 = vsel %vm716, %v473, %v715
      %vm718 = vcmask 1044484
      %v719 = vsel %vm718, %v487, %v717
      %vm720 = vcmask 1045509
      %v721 = vsel %vm720, %v501, %v719
      %vm722 = vcmask 1046534
      %v723 = vsel %vm722, %v515, %v721
      %vm724 = vcmask 1047559
      %v725 = vsel %vm724, %v529, %v723
      %v726 = vsel %vm712, %v452, %v438
      %v727 = vsel %vm714, %v466, %v726
      %v728 = vsel %vm716, %v480, %v727
      %v729 = vsel %vm718, %v494, %v728
      %v730 = vsel %vm720, %v508, %v729
      %v731 = vsel %vm722, %v522, %v730
      %v732 = vsel %vm724, %v536, %v731
      %v733 = vsel %vm712, %v557, %v543
      %v734 = vsel %vm714, %v571, %v733
      %v735 = vsel %vm716, %v585, %v734
      %v736 = vsel %vm718, %v599, %v735
      %v737 = vsel %vm720, %v613, %v736
      %v738 = vsel %vm722, %v627, %v737
      %v739 = vsel %vm724, %v641, %v738
      %v740 = vsel %vm712, %v564, %v550
      %v741 = vsel %vm714, %v578, %v740
      %v742 = vsel %vm716, %v592, %v741
      %v743 = vsel %vm718, %v606, %v742
      %v744 = vsel %vm720, %v620, %v743
      %v745 = vsel %vm722, %v634, %v744
      %v746 = vsel %vm724, %v648, %v745
      %vm749 = vcmask 523264
      %v750 = vsel %vm749, %v732, 0
      %v752 = vsel %vm749, %v746, 0
      %754 = vmatprep.subr.mxu0 0.0
      %755 = vmatpush1.msra.mxu0 %v649
      %756 = vmatprep.subr.mxu0 0.0
      %757 = vmatpush1.msra.mxu0 %v650
      %758 = vmatprep.subr.mxu0 0.0
      %759 = vmatpush1.msra.mxu0 %v651
      %760 = vmatprep.subr.mxu0 0.0
      %761 = vmatpush1.msra.mxu0 %v652
      %762 = vmatprep.subr.mxu0 0.0
      %763 = vmatpush1.msra.mxu0 %v653
      %764 = vmatprep.subr.mxu0 0.0
      %765 = vmatpush1.msra.mxu0 %v654
      %766 = vmatprep.subr.mxu0 0.0
      %767 = vmatpush1.msra.mxu0 %v655
      %768 = vmatprep.subr.mxu0 0.0
      %769 = vmatpush1.msra.mxu0 %v656
      %770 = vmatprep.subr.mxu0 0.0
      %771 = vmatpush1.msra.mxu0 %v657
      %772 = vmatprep.subr.mxu0 0.0
      %773 = vmatpush1.msra.mxu0 %v658
      %774 = vmatprep.subr.mxu0 0.0
      %775 = vmatpush1.msra.mxu0 %v659
      %776 = vmatprep.subr.mxu0 0.0
      %777 = vmatpush1.msra.mxu0 %v660
      %778 = vmatprep.subr.mxu0 0.0
      %779 = vmatpush1.msra.mxu0 %v661
      %780 = vmatprep.subr.mxu0 0.0
      %781 = vmatpush1.msra.mxu0 %v662
      %782 = vmatprep.subr.mxu0 0.0
      %783 = vmatpush1.msra.mxu0 %v663
      %784 = vmatprep.subr.mxu0 0.0
      %785 = vmatpush1.msra.mxu0 %v664
      %786 = vmatprep.subr.mxu0 0.0
      %787 = vmatpush1.msra.mxu0 %v665
      %788 = vmatprep.subr.mxu0 0.0
      %789 = vmatpush1.msra.mxu0 %v666
      %790 = vmatprep.subr.mxu0 0.0
      %791 = vmatpush1.msra.mxu0 %v667
      %792 = vmatprep.subr.mxu0 0.0
      %793 = vmatpush1.msra.mxu0 %v668
      %794 = vmatprep.subr.mxu0 0.0
      %795 = vmatpush1.msra.mxu0 %v669
      %796 = vmatprep.subr.mxu0 0.0
      %797 = vmatpush1.msra.mxu0 %v670
      %798 = vmatprep.subr.mxu0 0.0
      %799 = vmatpush1.msra.mxu0 %v671
      %800 = vmatprep.subr.mxu0 0.0
      %801 = vmatpush1.msra.mxu0 %v672
      %802 = vmatprep.subr.mxu0 0.0
      %803 = vmatpush1.msra.mxu0 0.0
      %804 = vmatprep.subr.mxu0 0.0
      %805 = vmatpush1.msra.mxu0 0.0
      %806 = vmatprep.subr.mxu0 0.0
      %807 = vmatpush1.msra.mxu0 0.0
      %808 = vmatprep.subr.mxu0 0.0
      %809 = vmatpush1.msra.mxu0 0.0
      %810 = vmatprep.subr.mxu0 0.0
      %811 = vmatpush1.msra.mxu0 0.0
      %812 = vmatprep.subr.mxu0 0.0
      %813 = vmatpush1.msra.mxu0 0.0
      %814 = vmatprep.subr.mxu0 0.0
      %815 = vmatpush1.msra.mxu0 0.0
      %816 = vmatprep.subr.mxu0 0.0
      %817 = vmatpush1.msra.mxu0 0.0
      %818 = vmatprep.mubr.f32.mxu0 %v750
      %819 = vmatmul.mubr.f32.gmra.mrb[0].mxu0 %v725
      %v820 = vpop.f32.mrb[0].mxu0
      %v821 = vadd.f32 %v678, %v820
      %v822 = vpop.f32.mrb[0].mxu0
      %823 = vmatprep.mubr.f32.mxu0 %v752
      %824 = vmatmul.mubr.f32.gmra.mrb[0].mxu0 %v739
      %v825 = vpop.f32.mrb[0].mxu0
      %v826 = vadd.f32 %v678, %v825
      %v827 = vpop.f32.mrb[0].mxu0
      %828 = vdwg.mxu0
      %v829 = vmax.f32 %v821, 0.0
      %v830 = vmax.f32 %v826, 0.0
      %v831 = vpack.c.bf16 %v830, %v829
      %v833 = vunpack.c.l.b16 %v831
      %v834 = vunpack.c.h.b16 %v831
      %v835 = vpack.c.b16 %v833, %v833
      %v836 = vpack.c.b16 %v834, %v834
      %839 = vst [vmem:[%s277] sm:$0xf] %v835
      %840 = vst [vmem:[%s277 + $0x4] sm:$0xf] %v836
      %s841 = smul.u32 2, %s20
      %p842 = scmp.lt.s32.totalorder %s19, 1
      %s843 = scalar_select %p842, %s19, 1
      %p844 = scmp.lt.s32.totalorder %s841, 1
      %s845 = scalar_select %p844, %s841, 1
      %s846 = smul.addr %s843, 2
      %s847 = sadd.s32 %s845, %s846
      %s848 = smul.addr %s847, 4
      %s849 = scalar_lea.vmem %s4, %s848
      // Predicated region
      $region37: #{transwcd_single_forward.2} parent=35 // pred_check
        %p850 = pneg %p145
      $region38: #{transwcd_single_forward.2} parent=35 // pred_check_branch
        %852 = sbr.rel (%p850) target = $region40
      $region39: #{transwcd_single_forward.2} parent=35 // pred_region
        %s853 = smul.u32 2, %s20
      $region40: #{transwcd_single_forward.2} parent=35 // pred_fallthru
        _
    $region36: #{transwcd_single_forward.2} parent=5 // pred_fallthru
      _
    %p854 = scmp.le.s32.totalorder 2, %s10
    // Predicated region
    $region41: #{transwcd_single_forward.2} parent=5 // pred_check
      %p855 = pneg %p854
    $region42: #{transwcd_single_forward.2} parent=5 // pred_check_branch
      %857 = sbr.rel (%p855) target = $region44
    $region43: #{transwcd_single_forward.2} parent=5 // pred_region
      %s858 = ssub.s32 %s10, 2
      // Predicated region
      $region45: #{transwcd_single_forward.2} parent=43 // pred_check
        %p859 = pneg %p151
      $region46: #{transwcd_single_forward.2} parent=43 // pred_check_branch
        %861 = sbr.rel (%p859) target = $region48
      $region47: #{transwcd_single_forward.2} parent=43 // pred_region
        %s862 = smul.u32 2, %s22
        %p863 = scmp.lt.s32.totalorder %s21, 1
        %s864 = scalar_select %p863, %s21, 1
        %p865 = scmp.lt.s32.totalorder %s862, 1
        %s866 = scalar_select %p865, %s862, 1
        %s867 = smul.addr %s864, 2
        %s868 = sadd.s32 %s866, %s867
        %s869 = smul.addr %s868, 4
        %s870 = scalar_lea.vmem %s4, %s869
      $region48: #{transwcd_single_forward.2} parent=43 // pred_fallthru
        _
    $region44: #{transwcd_single_forward.2} parent=5 // pred_fallthru
      _
  $region6: #{transwcd_single_forward.2} parent=0 // loop_footer
    %s14 = sadd.s32 1, %s10
  $region7: #{transwcd_single_forward.2} parent=0 // loop_footer_branch
    %9 = sbr.rel target = $region3
  $region8: #{transwcd_single_forward.2} parent=0 // loop_exit
    _

// kernel: tile.33
$region0: #{tile.33}
  #allocation0 [shape = 's32[1]{0}', space=sflag, size = 0x4, scoped, tag = 'scoped memory for tile.33']
  %s0 = inlined_call_operand.vmem [shape: f32[16], index: 0, kind: input, shape index: {}]
  %s1 = inlined_call_operand.vmem [shape: f32[8,16], index: 1, kind: output, shape index: {}]
  // Predicated region
  $region2: #{tile.33} parent=0 // pred_check
    _
  $region3: #{tile.33} parent=0 // pred_check_branch
    %3 = sbr.rel (0) target = $region5
  $region4: #{tile.33} parent=0 // pred_region
    _
  $region5: #{tile.33} parent=0 // pred_fallthru
    _
  %v4 = vld [vmem:[%s0] ss:$0 sm:$0xff]
  %5 = vst [vmem:[%s1] sm:$0xff] %v4

// kernel: tile.34
$region0: #{tile.34}
  %s0 = inlined_call_operand.vmem [shape: f32[8,16], index: 0, kind: input, shape index: {}]
  %s1 = inlined_call_operand.vmem [shape: f32[1,128], index: 1, kind: output, shape index: {}]
  $region1: #{tile.34} parent=0
    #allocation0 [shape = 'u8[4096]{0}', space=vmem, size = 0x1000, scoped, tag = 'scoped mem for output reshape']
    %v2 = vld [vmem:[%s0] sm:$0x1]
    %vm3 = vcmask 130048
    %4 = vst.msk [vmem:[#allocation0] sm:$0x1] %vm3, %v2
    %s5 = scalar_lea.vmem %s0, 7
    %v6 = vld [vmem:[%s5] sm:$0x1]
    %7 = vrot.lane.b32.xlu0 %v6, 112
    %v8 = vpop.permute.xlu0 %7
    %vm9 = vcmask 1048448
    %10 = vst.msk [vmem:[#allocation0] sm:$0x1] %vm9, %v8
    %s11 = scalar_lea.vmem %s0, 6
    %v12 = vld [vmem:[%s11] sm:$0x1]
    %13 = vrot.lane.b32.xlu0 %v12, 96
    %v14 = vpop.permute.xlu0 %13
    %vm15 = vcmask 917248
    %16 = vst.msk [vmem:[#allocation0] sm:$0x1] %vm15, %v14
    %s17 = scalar_lea.vmem %s0, 5
    %v18 = vld [vmem:[%s17] sm:$0x1]
    %19 = vrot.lane.b32.xlu0 %v18, 80
    %v20 = vpop.permute.xlu0 %19
    %vm21 = vcmask 786048
    %22 = vst.msk [vmem:[#allocation0] sm:$0x1] %vm21, %v20
    %s23 = scalar_lea.vmem %s0, 4
    %v24 = vld [vmem:[%s23] sm:$0x1]
    %25 = vrot.lane.b32.xlu0 %v24, 64
    %v26 = vpop.permute.xlu0 %25
    %vm27 = vcmask 654848
    %28 = vst.msk [vmem:[#allocation0] sm:$0x1] %vm27, %v26
    %s29 = scalar_lea.vmem %s0, 3
    %v30 = vld [vmem:[%s29] sm:$0x1]
    %31 = vrot.lane.b32.xlu0 %v30, 48
    %v32 = vpop.permute.xlu0 %31
    %vm33 = vcmask 523648
    %34 = vst.msk [vmem:[#allocation0] sm:$0x1] %vm33, %v32
    %s35 = scalar_lea.vmem %s0, 2
    %v36 = vld [vmem:[%s35] sm:$0x1]
    %37 = vrot.lane.b32.xlu0 %v36, 32
    %v38 = vpop.permute.xlu0 %37
    %vm39 = vcmask 392448
    %40 = vst.msk [vmem:[#allocation0] sm:$0x1] %vm39, %v38
    %s41 = scalar_lea.vmem %s0, 1
    %v42 = vld [vmem:[%s41] sm:$0x1]
    %43 = vrot.lane.b32.xlu0 %v42, 16
    %v44 = vpop.permute.xlu0 %43
    %vm45 = vcmask 261248
    %46 = vst.msk [vmem:[#allocation0] sm:$0x1] %vm45, %v44
    %s48 = sshllo.u32 0, 1
    %v50 = vld [vmem:[#allocation0] sm:%s48]
    %s51 = sshllo.u32 0, 1
    %52 = vst [vmem:[%s1] sm:%s51] %v50

// kernel: tile.38
$region0: #{tile.38}
  #allocation0 [shape = 's32[1]{0}', space=sflag, size = 0x4, scoped, tag = 'scoped memory for tile.38']
  %s0 = inlined_call_operand.vmem [shape: f32[32], index: 0, kind: input, shape index: {}]
  %s1 = inlined_call_operand.vmem [shape: f32[4,32], index: 1, kind: output, shape index: {}]
  // Predicated region
  $region2: #{tile.38} parent=0 // pred_check
    _
  $region3: #{tile.38} parent=0 // pred_check_branch
    %3 = sbr.rel (0) target = $region5
  $region4: #{tile.38} parent=0 // pred_region
    _
  $region5: #{tile.38} parent=0 // pred_fallthru
    _
  %v4 = vld [vmem:[%s0] ss:$0 sm:$0xff]
  %5 = vst [vmem:[%s1] sm:$0xf] %v4

// kernel: tile.39
$region0: #{tile.39}
  %s0 = inlined_call_operand.vmem [shape: f32[4,32], index: 0, kind: input, shape index: {}]
  %s1 = inlined_call_operand.vmem [shape: f32[1,128], index: 1, kind: output, shape index: {}]
  $region1: #{tile.39} parent=0
    #allocation0 [shape = 'u8[4096]{0}', space=vmem, size = 0x1000, scoped, tag = 'scoped mem for output reshape']
    #allocation1 [shape = 'u8[4096]{0}', space=vmem, size = 0x1000, scoped, tag = 'scoped mem for input reshape']
    %s3 = sshllo.u32 0, 4
    %v4 = vld [vmem:[%s0] sm:%s3]
    %5 = vst [vmem:[#allocation1] sm:%s3] %v4
    %v6 = vld [vmem:[#allocation1] sm:$0x1]
    %vm7 = vcmask 261120
    %8 = vst.msk [vmem:[#allocation0] sm:$0x1] %vm7, %v6
    %s9 = scalar_lea.vmem [#allocation1], 3
    %v10 = vld [vmem:[%s9] sm:$0x1]
    %11 = vrot.lane.b32.xlu0 %v10, 96
    %v12 = vpop.permute.xlu0 %11
    %vm13 = vcmask 1048320
    %14 = vst.msk [vmem:[#allocation0] sm:$0x1] %vm13, %v12
    %s15 = scalar_lea.vmem [#allocation1], 2
    %v16 = vld [vmem:[%s15] sm:$0x1]
    %17 = vrot.lane.b32.xlu0 %v16, 64
    %v18 = vpop.permute.xlu0 %17
    %vm19 = vcmask 785920
    %20 = vst.msk [vmem:[#allocation0] sm:$0x1] %vm19, %v18
    %s21 = scalar_lea.vmem [#allocation1], 1
    %v22 = vld [vmem:[%s21] sm:$0x1]
    %23 = vrot.lane.b32.xlu0 %v22, 32
    %v24 = vpop.permute.xlu0 %23
    %vm25 = vcmask 523520
    %26 = vst.msk [vmem:[#allocation0] sm:$0x1] %vm25, %v24
    %s28 = sshllo.u32 0, 1
    %v30 = vld [vmem:[#allocation0] sm:%s28]
    %s31 = sshllo.u32 0, 1
    %32 = vst [vmem:[%s1] sm:%s31] %v30

// kernel: tile.44
$region0: #{tile.44}
  %s0 = inlined_call_operand.vmem [shape: f32[2,64], index: 0, kind: input, shape index: {}]
  %s1 = inlined_call_operand.vmem [shape: f32[1,128], index: 1, kind: output, shape index: {}]
  $region1: #{tile.44} parent=0
    #allocation0 [shape = 'u8[4096]{0}', space=vmem, size = 0x1000, scoped, tag = 'scoped mem for output reshape']
    #allocation1 [shape = 'u8[4096]{0}', space=vmem, size = 0x1000, scoped, tag = 'scoped mem for input reshape']
    %s3 = sshllo.u32 0, 2
    %v4 = vld [vmem:[%s0] sm:%s3]
    %5 = vst [vmem:[#allocation1] sm:%s3] %v4
    %v6 = vld [vmem:[#allocation1] sm:$0x1]
    %vm7 = vcmask 523264
    %8 = vst.msk [vmem:[#allocation0] sm:$0x1] %vm7, %v6
    %s9 = scalar_lea.vmem [#allocation1], 1
    %v10 = vld [vmem:[%s9] sm:$0x1]
    %11 = vrot.lane.b32.xlu0 %v10, 64
    %v12 = vpop.permute.xlu0 %11
    %vm13 = vcmask 1048064
    %14 = vst.msk [vmem:[#allocation0] sm:$0x1] %vm13, %v12
    %s16 = sshllo.u32 0, 1
    %v18 = vld [vmem:[#allocation0] sm:%s16]
    %s19 = sshllo.u32 0, 1
    %20 = vst [vmem:[%s1] sm:%s19] %v18

// kernel: transwcd_single_forward.3
$region0: #{transwcd_single_forward.3}
  #allocation0 [shape = 'u32[]', space=smem, size = 0x4, offset = 0x4, fixed_abs, tag = 'smem constant byte address 0x4 - core index']
  #allocation1 [shape = 'u32[144,128]{1,0:T(1,128)}', space=vmem, size = 0x12000, scoped, tag = 'internal scratch']
  %s0 = inlined_call_operand.vmem [shape: bf16[2,16,128], index: 0, kind: input, shape index: {}]
  %s1 = inlined_call_operand.vmem [shape: f32[128,128], index: 1, kind: input, shape index: {}]
  %s2 = inlined_call_operand.vmem [shape: f32[1,128], index: 2, kind: input, shape index: {}]
  %s3 = inlined_call_operand.vmem [shape: f32[128,128], index: 3, kind: input, shape index: {}]
  %s4 = inlined_call_operand.vmem [shape: f32[1,128], index: 4, kind: input, shape index: {}]
  %s5 = inlined_call_operand.vmem [shape: f32[128,128], index: 5, kind: input, shape index: {}]
  %s6 = inlined_call_operand.vmem [shape: f32[1,128], index: 6, kind: input, shape index: {}]
  %s7 = inlined_call_operand.vmem [shape: f32[128,1], index: 7, kind: input, shape index: {}]
  %s8 = inlined_call_operand.vmem [shape: f32[2,1,1], index: 8, kind: output, shape index: {}]
  %s9 = sld [smem:[#allocation0]]
  $region65: #{transwcd_single_forward.3} parent=0
    _
  %s11 = ssub.s32 1, %s9
  %s12 = scalar_select 0, %s11, %s9
  loop: start=0, step=1, limit=4
  $region2: #{transwcd_single_forward.3} parent=0 // loop_pre_header
    _
  $region3: #{transwcd_single_forward.3} parent=0 // loop_header
    %s14 = sphi 0, %s18
    %p15 = scmp.ge.s32.totalorder %s14, 4
    %s24 = sphi 0, %s26
    %s27 = sphi 0, %s24
    %s28 = sphi 0, %s27
    %s44 = sphi 0, %s28
    %s48 = sphi 0, %s48
    %s50 = sphi 0, %s48
    %s51 = sphi 0, %s50
    %s65 = sphi 0, %s51
    %s69 = sphi 0, %s69
    %s71 = sphi 0, %s69
    %s72 = sphi 0, %s71
    %s86 = sphi 0, %s72
    %s90 = sphi 0, %s90
    %s92 = sphi 0, %s90
    %s93 = sphi 0, %s92
    %s107 = sphi 0, %s93
    %s111 = sphi 0, %s111
    %s113 = sphi 0, %s111
    %s114 = sphi 0, %s113
    %s128 = sphi 0, %s114
    %s132 = sphi 0, %s132
    %s134 = sphi 0, %s132
    %s135 = sphi 0, %s134
    %s149 = sphi 0, %s135
    %s153 = sphi 0, %s153
    %s155 = sphi 0, %s153
    %s156 = sphi 0, %s155
    %s170 = sphi 0, %s156
    %s174 = sphi 0, %s174
    %s176 = sphi 0, %s174
    %s177 = sphi 0, %s176
    %s191 = sphi 0, %s177
    %s197 = sphi 0, %s199
    %s200 = sphi 0, %s197
    %s201 = sphi 0, %s200
    %s217 = sphi 0, %s201
  $region4: #{transwcd_single_forward.3} parent=0 // loop_header_branch
    %17 = sbr.rel (%p15) target = $region8
  $region5: #{transwcd_single_forward.3} parent=0 // loop_body
    %s19 = ssub.s32 %s14, 1
    %s20 = ssub.s32 %s14, 2
    %s21 = sadd.s32 %s14, 1
    %s22 = ssub.s32 %s14, %s21
    %p23 = scmp.eq.s32.totalorder %s22, 0
    %s25 = sadd.s32 %s24, 1
    %s26 = scalar_select %p23, %s24, %s25
    %p29 = pneg %p23
    %p30 = scmp.eq.s32.totalorder %s14, 1
    %p31 = por %p29, %p30
    %p32 = scmp.ne.s32.totalorder %s24, %s27
    %p33 = scmp.eq.s32.totalorder %s14, 0
    %p34 = por %p32, %p33
    %p35 = scmp.ne.s32.totalorder %s24, %s27
    %p36 = scmp.eq.s32.totalorder %s19, 1
    %p37 = por %p35, %p36
    %p38 = scmp.ne.s32.totalorder %s27, %s28
    %p39 = scmp.eq.s32.totalorder %s19, 0
    %p40 = por %p38, %p39
    %p41 = scmp.ne.s32.totalorder %s27, %s28
    %p42 = scmp.eq.s32.totalorder %s20, 1
    %p43 = por %p41, %p42
    %p45 = scmp.ne.s32.totalorder %s28, %s44
    %p46 = scmp.eq.s32.totalorder %s20, 0
    %p47 = por %p45, %p46
    %s49 = sadd.s32 %s48, 1
    %p52 = scmp.eq.s32.totalorder %s14, 1
    %p53 = scmp.ne.s32.totalorder %s48, %s50
    %p54 = scmp.eq.s32.totalorder %s14, 0
    %p55 = por %p53, %p54
    %p56 = scmp.ne.s32.totalorder %s48, %s50
    %p57 = scmp.eq.s32.totalorder %s19, 1
    %p58 = por %p56, %p57
    %p59 = scmp.ne.s32.totalorder %s50, %s51
    %p60 = scmp.eq.s32.totalorder %s19, 0
    %p61 = por %p59, %p60
    %p62 = scmp.ne.s32.totalorder %s50, %s51
    %p63 = scmp.eq.s32.totalorder %s20, 1
    %p64 = por %p62, %p63
    %p66 = scmp.ne.s32.totalorder %s51, %s65
    %p67 = scmp.eq.s32.totalorder %s20, 0
    %p68 = por %p66, %p67
    %s70 = sadd.s32 %s69, 1
    %p73 = scmp.eq.s32.totalorder %s14, 1
    %p74 = scmp.ne.s32.totalorder %s69, %s71
    %p75 = scmp.eq.s32.totalorder %s14, 0
    %p76 = por %p74, %p75
    %p77 = scmp.ne.s32.totalorder %s69, %s71
    %p78 = scmp.eq.s32.totalorder %s19, 1
    %p79 = por %p77, %p78
    %p80 = scmp.ne.s32.totalorder %s71, %s72
    %p81 = scmp.eq.s32.totalorder %s19, 0
    %p82 = por %p80, %p81
    %p83 = scmp.ne.s32.totalorder %s71, %s72
    %p84 = scmp.eq.s32.totalorder %s20, 1
    %p85 = por %p83, %p84
    %p87 = scmp.ne.s32.totalorder %s72, %s86
    %p88 = scmp.eq.s32.totalorder %s20, 0
    %p89 = por %p87, %p88
    %s91 = sadd.s32 %s90, 1
    %p94 = scmp.eq.s32.totalorder %s14, 1
    %p95 = scmp.ne.s32.totalorder %s90, %s92
    %p96 = scmp.eq.s32.totalorder %s14, 0
    %p97 = por %p95, %p96
    %p98 = scmp.ne.s32.totalorder %s90, %s92
    %p99 = scmp.eq.s32.totalorder %s19, 1
    %p100 = por %p98, %p99
    %p101 = scmp.ne.s32.totalorder %s92, %s93
    %p102 = scmp.eq.s32.totalorder %s19, 0
    %p103 = por %p101, %p102
    %p104 = scmp.ne.s32.totalorder %s92, %s93
    %p105 = scmp.eq.s32.totalorder %s20, 1
    %p106 = por %p104, %p105
    %p108 = scmp.ne.s32.totalorder %s93, %s107
    %p109 = scmp.eq.s32.totalorder %s20, 0
    %p110 = por %p108, %p109
    %s112 = sadd.s32 %s111, 1
    %p115 = scmp.eq.s32.totalorder %s14, 1
    %p116 = scmp.ne.s32.totalorder %s111, %s113
    %p117 = scmp.eq.s32.totalorder %s14, 0
    %p118 = por %p116, %p117
    %p119 = scmp.ne.s32.totalorder %s111, %s113
    %p120 = scmp.eq.s32.totalorder %s19, 1
    %p121 = por %p119, %p120
    %p122 = scmp.ne.s32.totalorder %s113, %s114
    %p123 = scmp.eq.s32.totalorder %s19, 0
    %p124 = por %p122, %p123
    %p125 = scmp.ne.s32.totalorder %s113, %s114
    %p126 = scmp.eq.s32.totalorder %s20, 1
    %p127 = por %p125, %p126
    %p129 = scmp.ne.s32.totalorder %s114, %s128
    %p130 = scmp.eq.s32.totalorder %s20, 0
    %p131 = por %p129, %p130
    %s133 = sadd.s32 %s132, 1
    %p136 = scmp.eq.s32.totalorder %s14, 1
    %p137 = scmp.ne.s32.totalorder %s132, %s134
    %p138 = scmp.eq.s32.totalorder %s14, 0
    %p139 = por %p137, %p138
    %p140 = scmp.ne.s32.totalorder %s132, %s134
    %p141 = scmp.eq.s32.totalorder %s19, 1
    %p142 = por %p140, %p141
    %p143 = scmp.ne.s32.totalorder %s134, %s135
    %p144 = scmp.eq.s32.totalorder %s19, 0
    %p145 = por %p143, %p144
    %p146 = scmp.ne.s32.totalorder %s134, %s135
    %p147 = scmp.eq.s32.totalorder %s20, 1
    %p148 = por %p146, %p147
    %p150 = scmp.ne.s32.totalorder %s135, %s149
    %p151 = scmp.eq.s32.totalorder %s20, 0
    %p152 = por %p150, %p151
    %s154 = sadd.s32 %s153, 1
    %p157 = scmp.eq.s32.totalorder %s14, 1
    %p158 = scmp.ne.s32.totalorder %s153, %s155
    %p159 = scmp.eq.s32.totalorder %s14, 0
    %p160 = por %p158, %p159
    %p161 = scmp.ne.s32.totalorder %s153, %s155
    %p162 = scmp.eq.s32.totalorder %s19, 1
    %p163 = por %p161, %p162
    %p164 = scmp.ne.s32.totalorder %s155, %s156
    %p165 = scmp.eq.s32.totalorder %s19, 0
    %p166 = por %p164, %p165
    %p167 = scmp.ne.s32.totalorder %s155, %s156
    %p168 = scmp.eq.s32.totalorder %s20, 1
    %p169 = por %p167, %p168
    %p171 = scmp.ne.s32.totalorder %s156, %s170
    %p172 = scmp.eq.s32.totalorder %s20, 0
    %p173 = por %p171, %p172
    %s175 = sadd.s32 %s174, 1
    %p178 = scmp.eq.s32.totalorder %s14, 1
    %p179 = scmp.ne.s32.totalorder %s174, %s176
    %p180 = scmp.eq.s32.totalorder %s14, 0
    %p181 = por %p179, %p180
    %p182 = scmp.ne.s32.totalorder %s174, %s176
    %p183 = scmp.eq.s32.totalorder %s19, 1
    %p184 = por %p182, %p183
    %p185 = scmp.ne.s32.totalorder %s176, %s177
    %p186 = scmp.eq.s32.totalorder %s19, 0
    %p187 = por %p185, %p186
    %p188 = scmp.ne.s32.totalorder %s176, %s177
    %p189 = scmp.eq.s32.totalorder %s20, 1
    %p190 = por %p188, %p189
    %p192 = scmp.ne.s32.totalorder %s177, %s191
    %p193 = scmp.eq.s32.totalorder %s20, 0
    %p194 = por %p192, %p193
    %s195 = ssub.s32 %s14, %s21
    %p196 = scmp.eq.s32.totalorder %s195, 0
    %s198 = sadd.s32 %s197, 1
    %s199 = scalar_select %p196, %s197, %s198
    %p202 = pneg %p196
    %p203 = scmp.eq.s32.totalorder %s14, 1
    %p204 = por %p202, %p203
    %p205 = scmp.ne.s32.totalorder %s197, %s200
    %p206 = scmp.eq.s32.totalorder %s14, 0
    %p207 = por %p205, %p206
    %p208 = scmp.ne.s32.totalorder %s197, %s200
    %p209 = scmp.eq.s32.totalorder %s19, 1
    %p210 = por %p208, %p209
    %p211 = scmp.ne.s32.totalorder %s200, %s201
    %p212 = scmp.eq.s32.totalorder %s19, 0
    %p213 = por %p211, %p212
    %p214 = scmp.ne.s32.totalorder %s200, %s201
    %p215 = scmp.eq.s32.totalorder %s20, 1
    %p216 = por %p214, %p215
    %p218 = scmp.ne.s32.totalorder %s201, %s217
    %p219 = scmp.eq.s32.totalorder %s20, 0
    %p220 = por %p218, %p219
    %p221 = scmp.le.s32.totalorder 1, %s14
    %p222 = scmp.lt.s32.totalorder %s14, 3
    %p223 = pnand %p221, %p222
    %p224 = pneg %p223
    // Predicated region
    $region9: #{transwcd_single_forward.3} parent=5 // pred_check
      _
    $region10: #{transwcd_single_forward.3} parent=5 // pred_check_branch
      %226 = sbr.rel (%p223) target = $region12
    $region11: #{transwcd_single_forward.3} parent=5 // pred_region
      %s227 = ssub.s32 %s14, 1
      // Predicated region
      $region13: #{transwcd_single_forward.3} parent=11 // pred_check
        %p228 = pneg %p61
      $region14: #{transwcd_single_forward.3} parent=11 // pred_check_branch
        %230 = sbr.rel (%p228) target = $region16
      $region15: #{transwcd_single_forward.3} parent=11 // pred_region
        _
      $region16: #{transwcd_single_forward.3} parent=11 // pred_fallthru
        _
      // Predicated region
      $region17: #{transwcd_single_forward.3} parent=11 // pred_check
        %p231 = pneg %p82
      $region18: #{transwcd_single_forward.3} parent=11 // pred_check_branch
        %233 = sbr.rel (%p231) target = $region20
      $region19: #{transwcd_single_forward.3} parent=11 // pred_region
        _
      $region20: #{transwcd_single_forward.3} parent=11 // pred_fallthru
        _
      // Predicated region
      $region21: #{transwcd_single_forward.3} parent=11 // pred_check
        %p234 = pneg %p103
      $region22: #{transwcd_single_forward.3} parent=11 // pred_check_branch
        %236 = sbr.rel (%p234) target = $region24
      $region23: #{transwcd_single_forward.3} parent=11 // pred_region
        _
      $region24: #{transwcd_single_forward.3} parent=11 // pred_fallthru
        _
      // Predicated region
      $region25: #{transwcd_single_forward.3} parent=11 // pred_check
        %p237 = pneg %p124
      $region26: #{transwcd_single_forward.3} parent=11 // pred_check_branch
        %239 = sbr.rel (%p237) target = $region28
      $region27: #{transwcd_single_forward.3} parent=11 // pred_region
        _
      $region28: #{transwcd_single_forward.3} parent=11 // pred_fallthru
        _
      // Predicated region
      $region29: #{transwcd_single_forward.3} parent=11 // pred_check
        %p240 = pneg %p145
      $region30: #{transwcd_single_forward.3} parent=11 // pred_check_branch
        %242 = sbr.rel (%p240) target = $region32
      $region31: #{transwcd_single_forward.3} parent=11 // pred_region
        _
      $region32: #{transwcd_single_forward.3} parent=11 // pred_fallthru
        _
      // Predicated region
      $region33: #{transwcd_single_forward.3} parent=11 // pred_check
        %p243 = pneg %p166
      $region34: #{transwcd_single_forward.3} parent=11 // pred_check_branch
        %245 = sbr.rel (%p243) target = $region36
      $region35: #{transwcd_single_forward.3} parent=11 // pred_region
        _
      $region36: #{transwcd_single_forward.3} parent=11 // pred_fallthru
        _
      // Predicated region
      $region37: #{transwcd_single_forward.3} parent=11 // pred_check
        %p246 = pneg %p187
      $region38: #{transwcd_single_forward.3} parent=11 // pred_check_branch
        %248 = sbr.rel (%p246) target = $region40
      $region39: #{transwcd_single_forward.3} parent=11 // pred_region
        _
      $region40: #{transwcd_single_forward.3} parent=11 // pred_fallthru
        _
    $region12: #{transwcd_single_forward.3} parent=5 // pred_fallthru
      _
    %p249 = scmp.lt.s32.totalorder %s14, 2
    // Predicated region
    $region41: #{transwcd_single_forward.3} parent=5 // pred_check
      %p250 = pneg %p249
    $region42: #{transwcd_single_forward.3} parent=5 // pred_check_branch
      %252 = sbr.rel (%p250) target = $region44
    $region43: #{transwcd_single_forward.3} parent=5 // pred_region
      // Predicated region
      $region45: #{transwcd_single_forward.3} parent=43 // pred_check
        %p253 = pneg %p34
      $region46: #{transwcd_single_forward.3} parent=43 // pred_check_branch
        %255 = sbr.rel (%p253) target = $region48
      $region47: #{transwcd_single_forward.3} parent=43 // pred_region
        %p256 = scmp.lt.s32.totalorder %s14, 1
        %s257 = scalar_select %p256, %s14, 1
        %s258 = smul.addr %s257, 2
        %s259 = smul.addr %s258, 4
        %s260 = scalar_lea.vmem %s0, %s259
      $region48: #{transwcd_single_forward.3} parent=43 // pred_fallthru
        _
    $region44: #{transwcd_single_forward.3} parent=5 // pred_fallthru
      _
    %p261 = scmp.le.s32.totalorder 1, %s14
    %p262 = scmp.lt.s32.totalorder %s14, 3
    %p263 = pnand %p261, %p262
    %p264 = pneg %p263
    // Predicated region
    $region49: #{transwcd_single_forward.3} parent=5 // pred_check
      _
    $region50: #{transwcd_single_forward.3} parent=5 // pred_check_branch
      %266 = sbr.rel (%p263) target = $region52
    $region51: #{transwcd_single_forward.3} parent=5 // pred_region
      %s267 = ssub.s32 %s14, 1
      %p268 = scmp.lt.s32.totalorder %s19, 1
      %s269 = scalar_select %p268, %s19, 1
      %s270 = smul.addr %s269, 2
      %s271 = smul.addr %s270, 4
      %s272 = scalar_lea.vmem %s0, %s271
      %p273 = pneg %p40
      %p274 = pneg %p37
      %p275 = pneg %p61
      %p276 = pneg %p58
      %p277 = pneg %p82
      %p278 = pneg %p79
      %p279 = pneg %p103
      %p280 = pneg %p100
      %p281 = pneg %p124
      %p282 = pneg %p121
      %p283 = pneg %p145
      %p284 = pneg %p142
      %p285 = pneg %p166
      %p286 = pneg %p163
      %p287 = pneg %p187
      %p288 = pneg %p184
      %p289 = pneg %p213
      %p290 = pneg %p210
      %p291 = scmp.lt.s32.totalorder %s19, 1
      %s292 = scalar_select %p291, %s19, 1
      %s293 = scalar_lea.vmem %s8, %s292
      %p294 = scmp.lt.s32.totalorder %s19, 1
      %s295 = scalar_select %p294, %s19, 1
      %s296 = smul.addr %s295, 2
      %s297 = smul.addr %s296, 4
      %s298 = scalar_lea.vmem %s0, %s297
      %p299 = scmp.lt.s32.totalorder %s19, 1
      %s300 = scalar_select %p299, %s19, 1
      %s301 = scalar_lea.vmem %s8, %s300
      %v302 = vld [vmem:[%s298] sm:$0xf]
      %v303 = vld [vmem:[%s298 + $0x4] sm:$0xf]
      %v304 = vunpack.c.l.bf16 %v302
      %v305 = vunpack.c.l.bf16 %v303
      %v308 = vcombine.high %v304, %v304
      %v310 = vunpack.c.l.s4 1983009808
      %v311 = vunpack.c.0.s8 %v310
      %v312 = vlaneseq
      %v313 = vshrl.u32 %v312, 7
      %v314 = vsub.s32 %v311, %v313
      %v315 = vrot.slane %v304, %v314
      %v317 = vunpack.c.l.s4 1983009808
      %v318 = vunpack.c.0.s8 %v317
      %v319 = vlaneseq
      %v320 = vshrl.u32 %v319, 7
      %v321 = vsub.s32 %v318, %v320
      %v322 = vrot.slane %v308, %v321
      %v323 = vcombine.high %v315, %v315
      %v324 = vcombine.high %v322, %v322
      %v325 = vcombine.high %v305, %v305
      %v327 = vunpack.c.l.s4 1983009808
      %v328 = vunpack.c.0.s8 %v327
      %v329 = vlaneseq
      %v330 = vshrl.u32 %v329, 7
      %v331 = vsub.s32 %v328, %v330
      %v332 = vrot.slane %v305, %v331
      %v334 = vunpack.c.l.s4 1983009808
      %v335 = vunpack.c.0.s8 %v334
      %v336 = vlaneseq
      %v337 = vshrl.u32 %v336, 7
      %v338 = vsub.s32 %v335, %v337
      %v339 = vrot.slane %v325, %v338
      %v340 = vcombine.high %v332, %v332
      %v341 = vcombine.high %v339, %v339
      %vm350 = vcmask 1041408
      %v351 = vsel %vm350, %v315, 0.0
      %v352 = vrot.slane %v351, 4
      %v353 = vadd.f32 %v351, %v352
      %v354 = vrot.slane %v353, 2
      %v355 = vadd.f32 %v353, %v354
      %v356 = vrot.slane %v355, 1
      %v357 = vadd.f32 %v355, %v356
      %v358 = vsel %vm350, %v323, 0.0
      %v359 = vrot.slane %v358, 4
      %v360 = vadd.f32 %v358, %v359
      %v361 = vrot.slane %v360, 2
      %v362 = vadd.f32 %v360, %v361
      %v363 = vrot.slane %v362, 1
      %v364 = vadd.f32 %v362, %v363
      %v365 = vsel %vm350, %v322, 0.0
      %v366 = vrot.slane %v365, 4
      %v367 = vadd.f32 %v365, %v366
      %v368 = vrot.slane %v367, 2
      %v369 = vadd.f32 %v367, %v368
      %v370 = vrot.slane %v369, 1
      %v371 = vadd.f32 %v369, %v370
      %v372 = vsel %vm350, %v324, 0.0
      %v373 = vrot.slane %v372, 4
      %v374 = vadd.f32 %v372, %v373
      %v375 = vrot.slane %v374, 2
      %v376 = vadd.f32 %v374, %v375
      %v377 = vrot.slane %v376, 1
      %v378 = vadd.f32 %v376, %v377
      %v379 = vsel %vm350, %v332, 0.0
      %v380 = vrot.slane %v379, 4
      %v381 = vadd.f32 %v379, %v380
      %v382 = vrot.slane %v381, 2
      %v383 = vadd.f32 %v381, %v382
      %v384 = vrot.slane %v383, 1
      %v385 = vadd.f32 %v383, %v384
      %v386 = vsel %vm350, %v340, 0.0
      %v387 = vrot.slane %v386, 4
      %v388 = vadd.f32 %v386, %v387
      %v389 = vrot.slane %v388, 2
      %v390 = vadd.f32 %v388, %v389
      %v391 = vrot.slane %v390, 1
      %v392 = vadd.f32 %v390, %v391
      %v393 = vsel %vm350, %v339, 0.0
      %v394 = vrot.slane %v393, 4
      %v395 = vadd.f32 %v393, %v394
      %v396 = vrot.slane %v395, 2
      %v397 = vadd.f32 %v395, %v396
      %v398 = vrot.slane %v397, 1
      %v399 = vadd.f32 %v397, %v398
      %v400 = vsel %vm350, %v341, 0.0
      %v401 = vrot.slane %v400, 4
      %v402 = vadd.f32 %v400, %v401
      %v403 = vrot.slane %v402, 2
      %v404 = vadd.f32 %v402, %v403
      %v405 = vrot.slane %v404, 1
      %v406 = vadd.f32 %v404, %v405
      %v407 = vld [vmem:[%s1] sm:$0xff]
      %v408 = vld [vmem:[%s1 + $0x8] sm:$0xff]
      %v409 = vld [vmem:[%s1 + $0x10] sm:$0xff]
      %v410 = vld [vmem:[%s1 + $0x18] sm:$0xff]
      %v411 = vld [vmem:[%s1 + $0x20] sm:$0xff]
      %v412 = vld [vmem:[%s1 + $0x28] sm:$0xff]
      %v413 = vld [vmem:[%s1 + $0x30] sm:$0xff]
      %v414 = vld [vmem:[%s1 + $0x38] sm:$0xff]
      %v415 = vld [vmem:[%s1 + $0x40] sm:$0xff]
      %v416 = vld [vmem:[%s1 + $0x48] sm:$0xff]
      %v417 = vld [vmem:[%s1 + $0x50] sm:$0xff]
      %v418 = vld [vmem:[%s1 + $0x58] sm:$0xff]
      %v419 = vld [vmem:[%s1 + $0x60] sm:$0xff]
      %v420 = vld [vmem:[%s1 + $0x68] sm:$0xff]
      %v421 = vld [vmem:[%s1 + $0x70] sm:$0xff]
      %v422 = vld [vmem:[%s1 + $0x78] sm:$0xff]
      %v423 = vld [vmem:[%s2] sm:$0x1]
      %v425 = vlaneseq
      %v426 = vshrl.u32 %v425, 7
      %v427 = vsub.s32 0, %v426
      %v428 = vrot.slane %v423, %v427
      %vm438 = vcmask 1041409
      %v439 = vsel %vm438, %v364, %v357
      %vm440 = vcmask 1042434
      %v441 = vsel %vm440, %v371, %v439
      %vm442 = vcmask 1043459
      %v443 = vsel %vm442, %v378, %v441
      %vm444 = vcmask 1044484
      %v445 = vsel %vm444, %v385, %v443
      %vm446 = vcmask 1045509
      %v447 = vsel %vm446, %v392, %v445
      %vm448 = vcmask 1046534
      %v449 = vsel %vm448, %v399, %v447
      %vm450 = vcmask 1047559
      %v451 = vsel %vm450, %v406, %v449
      %453 = vmatprep.subr.mxu0 0.0
      %454 = vmatpush1.msra.mxu0 %v407
      %455 = vmatprep.subr.mxu0 0.0
      %456 = vmatpush1.msra.mxu0 %v408
      %457 = vmatprep.subr.mxu0 0.0
      %458 = vmatpush1.msra.mxu0 %v409
      %459 = vmatprep.subr.mxu0 0.0
      %460 = vmatpush1.msra.mxu0 %v410
      %461 = vmatprep.subr.mxu0 0.0
      %462 = vmatpush1.msra.mxu0 %v411
      %463 = vmatprep.subr.mxu0 0.0
      %464 = vmatpush1.msra.mxu0 %v412
      %465 = vmatprep.subr.mxu0 0.0
      %466 = vmatpush1.msra.mxu0 %v413
      %467 = vmatprep.subr.mxu0 0.0
      %468 = vmatpush1.msra.mxu0 %v414
      %469 = vmatprep.subr.mxu0 0.0
      %470 = vmatpush1.msra.mxu0 %v415
      %471 = vmatprep.subr.mxu0 0.0
      %472 = vmatpush1.msra.mxu0 %v416
      %473 = vmatprep.subr.mxu0 0.0
      %474 = vmatpush1.msra.mxu0 %v417
      %475 = vmatprep.subr.mxu0 0.0
      %476 = vmatpush1.msra.mxu0 %v418
      %477 = vmatprep.subr.mxu0 0.0
      %478 = vmatpush1.msra.mxu0 %v419
      %479 = vmatprep.subr.mxu0 0.0
      %480 = vmatpush1.msra.mxu0 %v420
      %481 = vmatprep.subr.mxu0 0.0
      %482 = vmatpush1.msra.mxu0 %v421
      %483 = vmatprep.subr.mxu0 0.0
      %484 = vmatpush1.msra.mxu0 %v422
      %485 = vmatprep.subr.mxu0 0.0
      %486 = vmatpush1.msra.mxu0 0.0
      %487 = vmatprep.subr.mxu0 0.0
      %488 = vmatpush1.msra.mxu0 0.0
      %489 = vmatprep.subr.mxu0 0.0
      %490 = vmatpush1.msra.mxu0 0.0
      %491 = vmatprep.subr.mxu0 0.0
      %492 = vmatpush1.msra.mxu0 0.0
      %493 = vmatprep.subr.mxu0 0.0
      %494 = vmatpush1.msra.mxu0 0.0
      %495 = vmatprep.subr.mxu0 0.0
      %496 = vmatpush1.msra.mxu0 0.0
      %497 = vmatprep.subr.mxu0 0.0
      %498 = vmatpush1.msra.mxu0 0.0
      %499 = vmatprep.subr.mxu0 0.0
      %500 = vmatpush1.msra.mxu0 0.0
      %501 = vmatprep.subr.mxu0 0.0
      %502 = vmatpush1.msra.mxu0 0.0
      %503 = vmatprep.subr.mxu0 0.0
      %504 = vmatpush1.msra.mxu0 0.0
      %505 = vmatprep.subr.mxu0 0.0
      %506 = vmatpush1.msra.mxu0 0.0
      %507 = vmatprep.subr.mxu0 0.0
      %508 = vmatpush1.msra.mxu0 0.0
      %509 = vmatprep.subr.mxu0 0.0
      %510 = vmatpush1.msra.mxu0 0.0
      %511 = vmatprep.subr.mxu0 0.0
      %512 = vmatpush1.msra.mxu0 0.0
      %513 = vmatprep.subr.mxu0 0.0
      %514 = vmatpush1.msra.mxu0 0.0
      %515 = vmatprep.subr.mxu0 0.0
      %516 = vmatpush1.msra.mxu0 0.0
      %517 = vmatprep.mubr.f32.mxu0 0.0
      %518 = vmatmul.mubr.f32.gmra.mrb[0].mxu0 %v451
      %v519 = vpop.f32.mrb[0].mxu0
      %v520 = vadd.f32 %v428, %v519
      %v521 = vpop.f32.mrb[0].mxu0
      %522 = vdwg.mxu0
      %v523 = vmax.f32 %v520, 0.0
      %v525 = vcombine.high %v523, %v523
      %v527 = vunpack.c.l.s4 1983009808
      %v528 = vunpack.c.0.s8 %v527
      %v529 = vlaneseq
      %v530 = vshrl.u32 %v529, 7
      %v531 = vsub.s32 %v528, %v530
      %v532 = vrot.slane %v523, %v531
      %v534 = vunpack.c.l.s4 1983009808
      %v535 = vunpack.c.0.s8 %v534
      %v536 = vlaneseq
      %v537 = vshrl.u32 %v536, 7
      %v538 = vsub.s32 %v535, %v537
      %v539 = vrot.slane %v525, %v538
      %v540 = vcombine.high %v532, %v532
      %v541 = vcombine.high %v539, %v539
      %v546 = vsel %vm350, %v532, 0.0
      %v547 = vrot.slane %v546, 4
      %v548 = vadd.f32 %v546, %v547
      %v549 = vrot.slane %v548, 2
      %v550 = vadd.f32 %v548, %v549
      %v551 = vrot.slane %v550, 1
      %v552 = vadd.f32 %v550, %v551
      %v553 = vsel %vm350, %v540, 0.0
      %v554 = vrot.slane %v553, 4
      %v555 = vadd.f32 %v553, %v554
      %v556 = vrot.slane %v555, 2
      %v557 = vadd.f32 %v555, %v556
      %v558 = vrot.slane %v557, 1
      %v559 = vadd.f32 %v557, %v558
      %v560 = vsel %vm350, %v539, 0.0
      %v561 = vrot.slane %v560, 4
      %v562 = vadd.f32 %v560, %v561
      %v563 = vrot.slane %v562, 2
      %v564 = vadd.f32 %v562, %v563
      %v565 = vrot.slane %v564, 1
      %v566 = vadd.f32 %v564, %v565
      %v567 = vsel %vm350, %v541, 0.0
      %v568 = vrot.slane %v567, 4
      %v569 = vadd.f32 %v567, %v568
      %v570 = vrot.slane %v569, 2
      %v571 = vadd.f32 %v569, %v570
      %v572 = vrot.slane %v571, 1
      %v573 = vadd.f32 %v571, %v572
      %v574 = vld [vmem:[%s3] sm:$0xff]
      %v575 = vld [vmem:[%s3 + $0x8] sm:$0xff]
      %v576 = vld [vmem:[%s3 + $0x10] sm:$0xff]
      %v577 = vld [vmem:[%s3 + $0x18] sm:$0xff]
      %v578 = vld [vmem:[%s3 + $0x20] sm:$0xff]
      %v579 = vld [vmem:[%s3 + $0x28] sm:$0xff]
      %v580 = vld [vmem:[%s3 + $0x30] sm:$0xff]
      %v581 = vld [vmem:[%s3 + $0x38] sm:$0xff]
      %v582 = vld [vmem:[%s3 + $0x40] sm:$0xff]
      %v583 = vld [vmem:[%s3 + $0x48] sm:$0xff]
      %v584 = vld [vmem:[%s3 + $0x50] sm:$0xff]
      %v585 = vld [vmem:[%s3 + $0x58] sm:$0xff]
      %v586 = vld [vmem:[%s3 + $0x60] sm:$0xff]
      %v587 = vld [vmem:[%s3 + $0x68] sm:$0xff]
      %v588 = vld [vmem:[%s3 + $0x70] sm:$0xff]
      %v589 = vld [vmem:[%s3 + $0x78] sm:$0xff]
      %v590 = vld [vmem:[%s4] sm:$0x1]
      %v592 = vlaneseq
      %v593 = vshrl.u32 %v592, 7
      %v594 = vsub.s32 0, %v593
      %v595 = vrot.slane %v590, %v594
      %v601 = vsel %vm438, %v559, %v552
      %v602 = vsel %vm440, %v566, %v601
      %v603 = vsel %vm442, %v573, %v602
      %605 = vmatprep.subr.mxu0 0.0
      %606 = vmatpush1.msra.mxu0 %v574
      %607 = vmatprep.subr.mxu0 0.0
      %608 = vmatpush1.msra.mxu0 %v575
      %609 = vmatprep.subr.mxu0 0.0
      %610 = vmatpush1.msra.mxu0 %v576
      %611 = vmatprep.subr.mxu0 0.0
      %612 = vmatpush1.msra.mxu0 %v577
      %613 = vmatprep.subr.mxu0 0.0
      %614 = vmatpush1.msra.mxu0 %v578
      %615 = vmatprep.subr.mxu0 0.0
      %616 = vmatpush1.msra.mxu0 %v579
      %617 = vmatprep.subr.mxu0 0.0
      %618 = vmatpush1.msra.mxu0 %v580
      %619 = vmatprep.subr.mxu0 0.0
      %620 = vmatpush1.msra.mxu0 %v581
      %621 = vmatprep.subr.mxu0 0.0
      %622 = vmatpush1.msra.mxu0 %v582
      %623 = vmatprep.subr.mxu0 0.0
      %624 = vmatpush1.msra.mxu0 %v583
      %625 = vmatprep.subr.mxu0 0.0
      %626 = vmatpush1.msra.mxu0 %v584
      %627 = vmatprep.subr.mxu0 0.0
      %628 = vmatpush1.msra.mxu0 %v585
      %629 = vmatprep.subr.mxu0 0.0
      %630 = vmatpush1.msra.mxu0 %v586
      %631 = vmatprep.subr.mxu0 0.0
      %632 = vmatpush1.msra.mxu0 %v587
      %633 = vmatprep.subr.mxu0 0.0
      %634 = vmatpush1.msra.mxu0 %v588
      %635 = vmatprep.subr.mxu0 0.0
      %636 = vmatpush1.msra.mxu0 %v589
      %637 = vmatprep.subr.mxu0 0.0
      %638 = vmatpush1.msra.mxu0 0.0
      %639 = vmatprep.subr.mxu0 0.0
      %640 = vmatpush1.msra.mxu0 0.0
      %641 = vmatprep.subr.mxu0 0.0
      %642 = vmatpush1.msra.mxu0 0.0
      %643 = vmatprep.subr.mxu0 0.0
      %644 = vmatpush1.msra.mxu0 0.0
      %645 = vmatprep.subr.mxu0 0.0
      %646 = vmatpush1.msra.mxu0 0.0
      %647 = vmatprep.subr.mxu0 0.0
      %648 = vmatpush1.msra.mxu0 0.0
      %649 = vmatprep.subr.mxu0 0.0
      %650 = vmatpush1.msra.mxu0 0.0
      %651 = vmatprep.subr.mxu0 0.0
      %652 = vmatpush1.msra.mxu0 0.0
      %653 = vmatprep.subr.mxu0 0.0
      %654 = vmatpush1.msra.mxu0 0.0
      %655 = vmatprep.subr.mxu0 0.0
      %656 = vmatpush1.msra.mxu0 0.0
      %657 = vmatprep.subr.mxu0 0.0
      %658 = vmatpush1.msra.mxu0 0.0
      %659 = vmatprep.subr.mxu0 0.0
      %660 = vmatpush1.msra.mxu0 0.0
      %661 = vmatprep.subr.mxu0 0.0
      %662 = vmatpush1.msra.mxu0 0.0
      %663 = vmatprep.subr.mxu0 0.0
      %664 = vmatpush1.msra.mxu0 0.0
      %665 = vmatprep.subr.mxu0 0.0
      %666 = vmatpush1.msra.mxu0 0.0
      %667 = vmatprep.subr.mxu0 0.0
      %668 = vmatpush1.msra.mxu0 0.0
      %669 = vmatprep.mubr.f32.mxu0 0.0
      %670 = vmatmul.mubr.f32.gmra.mrb[0].mxu0 %v603
      %v671 = vpop.f32.mrb[0].mxu0
      %v672 = vadd.f32 %v595, %v671
      %v673 = vpop.f32.mrb[0].mxu0
      %674 = vdwg.mxu0
      %v675 = vmax.f32 %v672, 0.0
      %v678 = vunpack.c.l.s4 1983009808
      %v679 = vunpack.c.0.s8 %v678
      %v680 = vlaneseq
      %v681 = vshrl.u32 %v680, 7
      %v682 = vsub.s32 %v679, %v681
      %v683 = vrot.slane %v675, %v682
      %v684 = vcombine.high %v683, %v683
      %v687 = vsel %vm350, %v683, 0.0
      %v688 = vrot.slane %v687, 4
      %v689 = vadd.f32 %v687, %v688
      %v690 = vrot.slane %v689, 2
      %v691 = vadd.f32 %v689, %v690
      %v692 = vrot.slane %v691, 1
      %v693 = vadd.f32 %v691, %v692
      %v694 = vsel %vm350, %v684, 0.0
      %v695 = vrot.slane %v694, 4
      %v696 = vadd.f32 %v694, %v695
      %v697 = vrot.slane %v696, 2
      %v698 = vadd.f32 %v696, %v697
      %v699 = vrot.slane %v698, 1
      %v700 = vadd.f32 %v698, %v699
      %v701 = vld [vmem:[%s5] sm:$0xff]
      %v702 = vld [vmem:[%s5 + $0x8] sm:$0xff]
      %v703 = vld [vmem:[%s5 + $0x10] sm:$0xff]
      %v704 = vld [vmem:[%s5 + $0x18] sm:$0xff]
      %v705 = vld [vmem:[%s5 + $0x20] sm:$0xff]
      %v706 = vld [vmem:[%s5 + $0x28] sm:$0xff]
      %v707 = vld [vmem:[%s5 + $0x30] sm:$0xff]
      %v708 = vld [vmem:[%s5 + $0x38] sm:$0xff]
      %v709 = vld [vmem:[%s5 + $0x40] sm:$0xff]
      %v710 = vld [vmem:[%s5 + $0x48] sm:$0xff]
      %v711 = vld [vmem:[%s5 + $0x50] sm:$0xff]
      %v712 = vld [vmem:[%s5 + $0x58] sm:$0xff]
      %v713 = vld [vmem:[%s5 + $0x60] sm:$0xff]
      %v714 = vld [vmem:[%s5 + $0x68] sm:$0xff]
      %v715 = vld [vmem:[%s5 + $0x70] sm:$0xff]
      %v716 = vld [vmem:[%s5 + $0x78] sm:$0xff]
      %v717 = vld [vmem:[%s6] sm:$0x1]
      %v719 = vlaneseq
      %v720 = vshrl.u32 %v719, 7
      %v721 = vsub.s32 0, %v720
      %v722 = vrot.slane %v717, %v721
      %v726 = vsel %vm438, %v700, %v693
      %728 = vmatprep.subr.mxu0 0.0
      %729 = vmatpush1.msra.mxu0 %v701
      %730 = vmatprep.subr.mxu0 0.0
      %731 = vmatpush1.msra.mxu0 %v702
      %732 = vmatprep.subr.mxu0 0.0
      %733 = vmatpush1.msra.mxu0 %v703
      %734 = vmatprep.subr.mxu0 0.0
      %735 = vmatpush1.msra.mxu0 %v704
      %736 = vmatprep.subr.mxu0 0.0
      %737 = vmatpush1.msra.mxu0 %v705
      %738 = vmatprep.subr.mxu0 0.0
      %739 = vmatpush1.msra.mxu0 %v706
      %740 = vmatprep.subr.mxu0 0.0
      %741 = vmatpush1.msra.mxu0 %v707
      %742 = vmatprep.subr.mxu0 0.0
      %743 = vmatpush1.msra.mxu0 %v708
      %744 = vmatprep.subr.mxu0 0.0
      %745 = vmatpush1.msra.mxu0 %v709
      %746 = vmatprep.subr.mxu0 0.0
      %747 = vmatpush1.msra.mxu0 %v710
      %748 = vmatprep.subr.mxu0 0.0
      %749 = vmatpush1.msra.mxu0 %v711
      %750 = vmatprep.subr.mxu0 0.0
      %751 = vmatpush1.msra.mxu0 %v712
      %752 = vmatprep.subr.mxu0 0.0
      %753 = vmatpush1.msra.mxu0 %v713
      %754 = vmatprep.subr.mxu0 0.0
      %755 = vmatpush1.msra.mxu0 %v714
      %756 = vmatprep.subr.mxu0 0.0
      %757 = vmatpush1.msra.mxu0 %v715
      %758 = vmatprep.subr.mxu0 0.0
      %759 = vmatpush1.msra.mxu0 %v716
      %760 = vmatprep.subr.mxu0 0.0
      %761 = vmatpush1.msra.mxu0 0.0
      %762 = vmatprep.subr.mxu0 0.0
      %763 = vmatpush1.msra.mxu0 0.0
      %764 = vmatprep.subr.mxu0 0.0
      %765 = vmatpush1.msra.mxu0 0.0
      %766 = vmatprep.subr.mxu0 0.0
      %767 = vmatpush1.msra.mxu0 0.0
      %768 = vmatprep.subr.mxu0 0.0
      %769 = vmatpush1.msra.mxu0 0.0
      %770 = vmatprep.subr.mxu0 0.0
      %771 = vmatpush1.msra.mxu0 0.0
      %772 = vmatprep.subr.mxu0 0.0
      %773 = vmatpush1.msra.mxu0 0.0
      %774 = vmatprep.subr.mxu0 0.0
      %775 = vmatpush1.msra.mxu0 0.0
      %776 = vmatprep.subr.mxu0 0.0
      %777 = vmatpush1.msra.mxu0 0.0
      %778 = vmatprep.subr.mxu0 0.0
      %779 = vmatpush1.msra.mxu0 0.0
      %780 = vmatprep.subr.mxu0 0.0
      %781 = vmatpush1.msra.mxu0 0.0
      %782 = vmatprep.subr.mxu0 0.0
      %783 = vmatpush1.msra.mxu0 0.0
      %784 = vmatprep.subr.mxu0 0.0
      %785 = vmatpush1.msra.mxu0 0.0
      %786 = vmatprep.subr.mxu0 0.0
      %787 = vmatpush1.msra.mxu0 0.0
      %788 = vmatprep.subr.mxu0 0.0
      %789 = vmatpush1.msra.mxu0 0.0
      %790 = vmatprep.subr.mxu0 0.0
      %791 = vmatpush1.msra.mxu0 0.0
      %792 = vmatprep.mubr.f32.mxu0 0.0
      %793 = vmatmul.mubr.f32.gmra.mrb[0].mxu0 %v726
      %v794 = vpop.f32.mrb[0].mxu0
      %v795 = vadd.f32 %v722, %v794
      %v796 = vpop.f32.mrb[0].mxu0
      %797 = vdwg.mxu0
      %v798 = vmax.f32 %v795, 0.0
      %v799 = vsel %vm350, %v798, 0.0
      %v800 = vrot.slane %v799, 4
      %v801 = vadd.f32 %v799, %v800
      %v802 = vrot.slane %v801, 2
      %v803 = vadd.f32 %v801, %v802
      %v804 = vrot.slane %v803, 1
      %v805 = vadd.f32 %v803, %v804
      %v806 = vld [vmem:[%s7] sm:$0xff]
      %v807 = vld [vmem:[%s7 + $0x8] sm:$0xff]
      %v808 = vld [vmem:[%s7 + $0x10] sm:$0xff]
      %v809 = vld [vmem:[%s7 + $0x18] sm:$0xff]
      %v810 = vld [vmem:[%s7 + $0x20] sm:$0xff]
      %v811 = vld [vmem:[%s7 + $0x28] sm:$0xff]
      %v812 = vld [vmem:[%s7 + $0x30] sm:$0xff]
      %v813 = vld [vmem:[%s7 + $0x38] sm:$0xff]
      %v814 = vld [vmem:[%s7 + $0x40] sm:$0xff]
      %v815 = vld [vmem:[%s7 + $0x48] sm:$0xff]
      %v816 = vld [vmem:[%s7 + $0x50] sm:$0xff]
      %v817 = vld [vmem:[%s7 + $0x58] sm:$0xff]
      %v818 = vld [vmem:[%s7 + $0x60] sm:$0xff]
      %v819 = vld [vmem:[%s7 + $0x68] sm:$0xff]
      %v820 = vld [vmem:[%s7 + $0x70] sm:$0xff]
      %v821 = vld [vmem:[%s7 + $0x78] sm:$0xff]
      %822 = vmatprep.subr.mxu0 0.0
      %823 = vmatpush1.msra.mxu0 %v806
      %824 = vmatprep.subr.mxu0 0.0
      %825 = vmatpush1.msra.mxu0 %v807
      %826 = vmatprep.subr.mxu0 0.0
      %827 = vmatpush1.msra.mxu0 %v808
      %828 = vmatprep.subr.mxu0 0.0
      %829 = vmatpush1.msra.mxu0 %v809
      %830 = vmatprep.subr.mxu0 0.0
      %831 = vmatpush1.msra.mxu0 %v810
      %832 = vmatprep.subr.mxu0 0.0
      %833 = vmatpush1.msra.mxu0 %v811
      %834 = vmatprep.subr.mxu0 0.0
      %835 = vmatpush1.msra.mxu0 %v812
      %836 = vmatprep.subr.mxu0 0.0
      %837 = vmatpush1.msra.mxu0 %v813
      %838 = vmatprep.subr.mxu0 0.0
      %839 = vmatpush1.msra.mxu0 %v814
      %840 = vmatprep.subr.mxu0 0.0
      %841 = vmatpush1.msra.mxu0 %v815
      %842 = vmatprep.subr.mxu0 0.0
      %843 = vmatpush1.msra.mxu0 %v816
      %844 = vmatprep.subr.mxu0 0.0
      %845 = vmatpush1.msra.mxu0 %v817
      %846 = vmatprep.subr.mxu0 0.0
      %847 = vmatpush1.msra.mxu0 %v818
      %848 = vmatprep.subr.mxu0 0.0
      %849 = vmatpush1.msra.mxu0 %v819
      %850 = vmatprep.subr.mxu0 0.0
      %851 = vmatpush1.msra.mxu0 %v820
      %852 = vmatprep.subr.mxu0 0.0
      %853 = vmatpush1.msra.mxu0 %v821
      %854 = vmatprep.subr.mxu0 0.0
      %855 = vmatpush1.msra.mxu0 0.0
      %856 = vmatprep.subr.mxu0 0.0
      %857 = vmatpush1.msra.mxu0 0.0
      %858 = vmatprep.subr.mxu0 0.0
      %859 = vmatpush1.msra.mxu0 0.0
      %860 = vmatprep.subr.mxu0 0.0
      %861 = vmatpush1.msra.mxu0 0.0
      %862 = vmatprep.subr.mxu0 0.0
      %863 = vmatpush1.msra.mxu0 0.0
      %864 = vmatprep.subr.mxu0 0.0
      %865 = vmatpush1.msra.mxu0 0.0
      %866 = vmatprep.subr.mxu0 0.0
      %867 = vmatpush1.msra.mxu0 0.0
      %868 = vmatprep.subr.mxu0 0.0
      %869 = vmatpush1.msra.mxu0 0.0
      %870 = vmatprep.subr.mxu0 0.0
      %871 = vmatpush1.msra.mxu0 0.0
      %872 = vmatprep.subr.mxu0 0.0
      %873 = vmatpush1.msra.mxu0 0.0
      %874 = vmatprep.subr.mxu0 0.0
      %875 = vmatpush1.msra.mxu0 0.0
      %876 = vmatprep.subr.mxu0 0.0
      %877 = vmatpush1.msra.mxu0 0.0
      %878 = vmatprep.subr.mxu0 0.0
      %879 = vmatpush1.msra.mxu0 0.0
      %880 = vmatprep.subr.mxu0 0.0
      %881 = vmatpush1.msra.mxu0 0.0
      %882 = vmatprep.subr.mxu0 0.0
      %883 = vmatpush1.msra.mxu0 0.0
      %884 = vmatprep.subr.mxu0 0.0
      %885 = vmatpush1.msra.mxu0 0.0
      %886 = vmatprep.mubr.f32.mxu0 0.0
      %887 = vmatmul.mubr.f32.gmra.mrb[0].mxu0 %v805
      %v888 = vpop.f32.mrb[0].mxu0
      %v889 = vadd.f32 0.0, %v888
      %v890 = vpop.f32.mrb[0].mxu0
      %891 = vdwg.mxu0
      %vm892 = vcmask 0
      %893 = vst.msk [vmem:[%s301] sm:$0x1] %vm892, %v889
      %p894 = scmp.lt.s32.totalorder %s19, 1
      %s895 = scalar_select %p894, %s19, 1
      %s896 = scalar_lea.vmem %s8, %s895
      // Predicated region
      $region53: #{transwcd_single_forward.3} parent=51 // pred_check
        %p897 = pneg %p210
      $region54: #{transwcd_single_forward.3} parent=51 // pred_check_branch
        %899 = sbr.rel (%p897) target = $region56
      $region55: #{transwcd_single_forward.3} parent=51 // pred_region
        _
      $region56: #{transwcd_single_forward.3} parent=51 // pred_fallthru
        _
    $region52: #{transwcd_single_forward.3} parent=5 // pred_fallthru
      _
    %p900 = scmp.le.s32.totalorder 2, %s14
    // Predicated region
    $region57: #{transwcd_single_forward.3} parent=5 // pred_check
      %p901 = pneg %p900
    $region58: #{transwcd_single_forward.3} parent=5 // pred_check_branch
      %903 = sbr.rel (%p901) target = $region60
    $region59: #{transwcd_single_forward.3} parent=5 // pred_region
      %s904 = ssub.s32 %s14, 2
      // Predicated region
      $region61: #{transwcd_single_forward.3} parent=59 // pred_check
        %p905 = pneg %p216
      $region62: #{transwcd_single_forward.3} parent=59 // pred_check_branch
        %907 = sbr.rel (%p905) target = $region64
      $region63: #{transwcd_single_forward.3} parent=59 // pred_region
        %p908 = scmp.lt.s32.totalorder %s20, 1
        %s909 = scalar_select %p908, %s20, 1
        %s910 = scalar_lea.vmem %s8, %s909
      $region64: #{transwcd_single_forward.3} parent=59 // pred_fallthru
        _
    $region60: #{transwcd_single_forward.3} parent=5 // pred_fallthru
      _
  $region6: #{transwcd_single_forward.3} parent=0 // loop_footer
    %s18 = sadd.s32 1, %s14
  $region7: #{transwcd_single_forward.3} parent=0 // loop_footer_branch
    %13 = sbr.rel target = $region3
  $region8: #{transwcd_single_forward.3} parent=0 // loop_exit
    _

</llo_original>
